<compile_context>
chip_gen: v5e
topology: v5e:2x2
jax: 0.10.0
libtpu: 0.0.40
codegen_flags: <defaults>
</compile_context>

<pallas_src>
import functools
import math

import jax
import jax.numpy as jnp
from jax.experimental import pallas as pl
from jax.experimental.pallas import tpu as pltpu

# ---------------------------- model hyperparams -----------------------------
HIDDEN = 32          # phobert.config.hidden_size (small synthetic)
NUM_HEADS = 2
HEAD_DIM = HIDDEN // NUM_HEADS
FFN = 4 * HIDDEN
NUM_LAYERS = 2
VOCAB = 100
MAX_POS = 16
NUM_FEATURES = 54    # as in the PyTorch module
FEAT_PAD = 64        # zero-padded so in-kernel dims are clean
NUM_CLASSES = 2
CLS_PAD = 128        # lane-dense padded logits (sliced to NUM_CLASSES outside)
LN_EPS = 1e-5

VMEM_SPEC = pl.BlockSpec(memory_space=pltpu.MemorySpace.VMEM)


# ------------------------------ in-kernel helpers ----------------------------
def _layernorm(x, g, b, eps=LN_EPS):
    mean = jnp.mean(x, axis=-1, keepdims=True)
    var = jnp.mean((x - mean) ** 2, axis=-1, keepdims=True)
    return (x - mean) * jax.lax.rsqrt(var + eps) * g + b


# ------------------------------- fused kernel --------------------------------
def _fused_forward_kernel(
    x_ref, mask_ref, feat_ref,
    emb_g_ref, emb_b_ref,
    wqkv_ref, bqkv_ref, wo_ref, bo_ref,
    ln1_g_ref, ln1_b_ref,
    w1_ref, b1_ref, w2_ref, b2_ref,
    ln2_g_ref, ln2_b_ref,
    wf_ref, bf_ref, wc1_ref, bc1_ref, wc2_ref, bc2_ref,
    out_ref,
    *, batch, seq):
    scale = 1.0 / math.sqrt(HEAD_DIM)

    # ---- embedding layernorm ----
    x = _layernorm(x_ref[...], emb_g_ref[...], emb_b_ref[...])       # (B*S, H)

    # ---- transformer encoder layers (statically unrolled) ----
    for l in range(NUM_LAYERS):
        # fused QKV projection: one (B*S, H) x (H, 3H) matmul
        qkv = (jnp.dot(x, wqkv_ref[l], preferred_element_type=jnp.float32)
               + bqkv_ref[l])                                         # (B*S, 3H)

        # per-(batch, head) attention, unrolled; everything stays in vregs
        ctx_rows = []
        for b in range(batch):
            r0 = b * seq
            bias = mask_ref[b:b + 1, :]                               # (1, S)
            head_ctx = []
            for h in range(NUM_HEADS):
                c = h * HEAD_DIM
                q = qkv[r0:r0 + seq, c:c + HEAD_DIM]                  # (S, Dh)
                k = qkv[r0:r0 + seq, HIDDEN + c:HIDDEN + c + HEAD_DIM]
                v = qkv[r0:r0 + seq, 2 * HIDDEN + c:2 * HIDDEN + c + HEAD_DIM]
                s = jax.lax.dot_general(
                    q, k, (((1,), (1,)), ((), ())),
                    preferred_element_type=jnp.float32) * scale       # (S, S)
                s = s + bias                                          # key mask
                s = s - jnp.max(s, axis=-1, keepdims=True)
                p = jnp.exp(s)
                p = p * pl.reciprocal(jnp.sum(p, axis=-1, keepdims=True),
                                      approx=True)
                head_ctx.append(
                    jnp.dot(p, v, preferred_element_type=jnp.float32))
            ctx_rows.append(jnp.concatenate(head_ctx, axis=-1))       # (S, H)
        ctx = jnp.concatenate(ctx_rows, axis=0)                       # (B*S, H)

        attn_out = (jnp.dot(ctx, wo_ref[l], preferred_element_type=jnp.float32)
                    + bo_ref[l])
        x = _layernorm(x + attn_out, ln1_g_ref[l], ln1_b_ref[l])

        h1 = (jnp.dot(x, w1_ref[l], preferred_element_type=jnp.float32)
              + b1_ref[l])
        h1 = jax.nn.gelu(h1, approximate=True)
        h2 = (jnp.dot(h1, w2_ref[l], preferred_element_type=jnp.float32)
              + b2_ref[l])
        x = _layernorm(x + h2, ln2_g_ref[l], ln2_b_ref[l])

    # ---- CLS pooling (token 0 of each sequence); dropout = identity ----
    cls = jnp.concatenate([x[b * seq:b * seq + 1, :] for b in range(batch)],
                          axis=0)                                     # (B, H)

    # ---- feature_network: Linear(54->64) + ReLU (input zero-padded to 64) ----
    f = (jnp.dot(feat_ref[...], wf_ref[...], preferred_element_type=jnp.float32)
         + bf_ref[...])
    f = jnp.maximum(f, 0.0)                                           # (B, 64)

    # ---- classifier: Linear(96->128) + ReLU + Linear(128->2, lane-padded) ----
    combined = jnp.concatenate([cls, f], axis=-1)                     # (B, 96)
    h = (jnp.dot(combined, wc1_ref[...], preferred_element_type=jnp.float32)
         + bc1_ref[...])
    h = jnp.maximum(h, 0.0)                                           # (B, 128)
    out_ref[...] = (jnp.dot(h, wc2_ref[...], preferred_element_type=jnp.float32)
                    + bc2_ref[...])                                   # (B, 128)


# ------------------------------- model wrapper --------------------------------
def hybrid_phobert_classifier(params, input_ids, attention_mask, features):
    batch, seq = input_ids.shape

    # Embedding gather + positional add: XLA glue (no clean Pallas equivalent
    # for tiny-vocab gather; everything downstream is fused in one kernel).
    we = params["word_emb"][input_ids]                                # (B, S, H)
    pe = params["pos_emb"][:seq][None, :, :]                          # (1, S, H)
    x = (we + pe).reshape(batch * seq, HIDDEN).astype(jnp.float32)

    mask_bias = (1.0 - attention_mask.astype(jnp.float32)) * -1e9     # (B, S)
    feats = jnp.pad(features.astype(jnp.float32),
                    ((0, 0), (0, FEAT_PAD - NUM_FEATURES)))           # (B, 64)

    head = params["head"]
    kernel = functools.partial(_fused_forward_kernel, batch=batch, seq=seq)
    logits_padded = pl.pallas_call(
        kernel,
        out_shape=jax.ShapeDtypeStruct((batch, CLS_PAD), jnp.float32),
        in_specs=[VMEM_SPEC] * 23,
        out_specs=VMEM_SPEC,
    )(x, mask_bias, feats,
      params["emb_ln_g"], params["emb_ln_b"],
      params["wqkv"], params["bqkv"], params["wo"], params["bo"],
      params["ln1_g"], params["ln1_b"],
      params["w1"], params["b1"], params["w2"], params["b2"],
      params["ln2_g"], params["ln2_b"],
      head["wf"], head["bf"], head["wc1"], head["bc1"],
      head["wc2"], head["bc2"])

    return logits_padded[:, :NUM_CLASSES]


# ------------------------------- parameter init --------------------------------
def init_params(key):
    keys = iter(jax.random.split(key, 64))

    def nrm(shape, scale=0.02):
        return (scale * jax.random.normal(next(keys), shape)).astype(jnp.float32)

    wqkv, wo, w1, w2 = [], [], [], []
    for _ in range(NUM_LAYERS):
        wq, wk, wv = (nrm((HIDDEN, HIDDEN)) for _ in range(3))
        wqkv.append(jnp.concatenate([wq, wk, wv], axis=1))            # (H, 3H)
        wo.append(nrm((HIDDEN, HIDDEN)))
        w1.append(nrm((HIDDEN, FFN)))
        w2.append(nrm((FFN, HIDDEN)))

    # feature_network Linear(54, 64) -> padded to (64, 64) with zero rows
    wf_raw = nrm((NUM_FEATURES, 64), scale=0.1)
    wf = jnp.zeros((FEAT_PAD, 64), jnp.float32).at[:NUM_FEATURES].set(wf_raw)
    # classifier layer 2: (128, 2) padded to (128, 128) with zero columns
    wc2_raw = nrm((128, NUM_CLASSES), scale=0.1)
    wc2 = jnp.zeros((128, CLS_PAD), jnp.float32).at[:, :NUM_CLASSES].set(wc2_raw)

    head = dict(
        wf=wf, bf=jnp.zeros((1, 64), jnp.float32),
        wc1=nrm((HIDDEN + 64, 128), scale=0.1),
        bc1=jnp.zeros((1, 128), jnp.float32),
        wc2=wc2, bc2=jnp.zeros((1, CLS_PAD), jnp.float32),
    )

    return dict(
        word_emb=nrm((VOCAB, HIDDEN)),
        pos_emb=nrm((MAX_POS, HIDDEN)),
        emb_ln_g=jnp.ones((1, HIDDEN), jnp.float32),
        emb_ln_b=jnp.zeros((1, HIDDEN), jnp.float32),
        wqkv=jnp.stack(wqkv),                                          # (L, H, 3H)
        bqkv=jnp.zeros((NUM_LAYERS, 1, 3 * HIDDEN), jnp.float32),
        wo=jnp.stack(wo),
        bo=jnp.zeros((NUM_LAYERS, 1, HIDDEN), jnp.float32),
        ln1_g=jnp.ones((NUM_LAYERS, 1, HIDDEN), jnp.float32),
        ln1_b=jnp.zeros((NUM_LAYERS, 1, HIDDEN), jnp.float32),
        w1=jnp.stack(w1),
        b1=jnp.zeros((NUM_LAYERS, 1, FFN), jnp.float32),
        w2=jnp.stack(w2),
        b2=jnp.zeros((NUM_LAYERS, 1, HIDDEN), jnp.float32),
        ln2_g=jnp.ones((NUM_LAYERS, 1, HIDDEN), jnp.float32),
        ln2_b=jnp.zeros((NUM_LAYERS, 1, HIDDEN), jnp.float32),
        head=head,
    )


# ------------------------------------ main -------------------------------------
if __name__ == "__main__":
    key = jax.random.PRNGKey(0)
    pkey, dkey = jax.random.split(key)
    params = init_params(pkey)

    B, S = 2, 8
    input_ids = jax.random.randint(jax.random.fold_in(dkey, 0), (B, S), 0, VOCAB)
    attention_mask = jnp.ones((B, S), dtype=jnp.int32)
    features = jax.random.normal(jax.random.fold_in(dkey, 1), (B, NUM_FEATURES),
                                 dtype=jnp.float32)

    fwd = jax.jit(hybrid_phobert_classifier)
    logits = fwd(params, input_ids, attention_mask, features)
    logits = jax.block_until_ready(logits)
    assert logits.shape == (B, NUM_CLASSES)
    assert bool(jnp.all(jnp.isfinite(logits)))
    print("KERNEL_OK")
</pallas_src>

<mosaic_0001>
module attributes {stable_mosaic.version = 11 : i64} {
  func.func @_fused_forward_kernel(%arg0: memref<16x32xf32, #tpu.memory_space<vmem>>, %arg1: memref<2x8xf32, #tpu.memory_space<vmem>>, %arg2: memref<2x64xf32, #tpu.memory_space<vmem>>, %arg3: memref<1x32xf32, #tpu.memory_space<vmem>>, %arg4: memref<1x32xf32, #tpu.memory_space<vmem>>, %arg5: memref<2x32x96xf32, #tpu.memory_space<vmem>>, %arg6: memref<2x1x96xf32, #tpu.memory_space<vmem>>, %arg7: memref<2x32x32xf32, #tpu.memory_space<vmem>>, %arg8: memref<2x1x32xf32, #tpu.memory_space<vmem>>, %arg9: memref<2x1x32xf32, #tpu.memory_space<vmem>>, %arg10: memref<2x1x32xf32, #tpu.memory_space<vmem>>, %arg11: memref<2x32x128xf32, #tpu.memory_space<vmem>>, %arg12: memref<2x1x128xf32, #tpu.memory_space<vmem>>, %arg13: memref<2x128x32xf32, #tpu.memory_space<vmem>>, %arg14: memref<2x1x32xf32, #tpu.memory_space<vmem>>, %arg15: memref<2x1x32xf32, #tpu.memory_space<vmem>>, %arg16: memref<2x1x32xf32, #tpu.memory_space<vmem>>, %arg17: memref<64x64xf32, #tpu.memory_space<vmem>>, %arg18: memref<1x64xf32, #tpu.memory_space<vmem>>, %arg19: memref<96x128xf32, #tpu.memory_space<vmem>>, %arg20: memref<1x128xf32, #tpu.memory_space<vmem>>, %arg21: memref<128x128xf32, #tpu.memory_space<vmem>>, %arg22: memref<1x128xf32, #tpu.memory_space<vmem>>, %arg23: memref<2x128xf32, #tpu.memory_space<vmem>>) attributes {dimension_semantics = [], scalar_prefetch = 0 : i64, scratch_operands = 0 : i64, tpu.core_type = #tpu.core_type<tc>} {
    %c0 = arith.constant 0 : index
    %c0_0 = arith.constant 0 : index
    %0 = vector.load %arg0[%c0, %c0_0] : memref<16x32xf32, #tpu.memory_space<vmem>>, vector<16x32xf32>
    %c0_1 = arith.constant 0 : index
    %c0_2 = arith.constant 0 : index
    %1 = vector.load %arg3[%c0_1, %c0_2] : memref<1x32xf32, #tpu.memory_space<vmem>>, vector<1x32xf32>
    %c0_3 = arith.constant 0 : index
    %c0_4 = arith.constant 0 : index
    %2 = vector.load %arg4[%c0_3, %c0_4] : memref<1x32xf32, #tpu.memory_space<vmem>>, vector<1x32xf32>
    %cst = arith.constant dense<0.000000e+00> : vector<16xf32>
    %3 = vector.multi_reduction <add>, %0, %cst [1] : vector<16x32xf32> to vector<16xf32>
    %4 = vector.shape_cast %3 : vector<16xf32> to vector<16x1xf32>
    %cst_5 = arith.constant 3.200000e+01 : f32
    %5 = vector.broadcast %cst_5 : f32 to vector<16x1xf32>
    %6 = arith.divf %4, %5 : vector<16x1xf32>
    %7 = vector.broadcast %6 : vector<16x1xf32> to vector<16x32xf32>
    %8 = arith.subf %0, %7 : vector<16x32xf32>
    %9 = arith.mulf %8, %8 : vector<16x32xf32>
    %cst_6 = arith.constant dense<0.000000e+00> : vector<16xf32>
    %10 = vector.multi_reduction <add>, %9, %cst_6 [1] : vector<16x32xf32> to vector<16xf32>
    %11 = vector.shape_cast %10 : vector<16xf32> to vector<16x1xf32>
    %cst_7 = arith.constant 3.200000e+01 : f32
    %12 = vector.broadcast %cst_7 : f32 to vector<16x1xf32>
    %13 = arith.divf %11, %12 : vector<16x1xf32>
    %14 = vector.broadcast %6 : vector<16x1xf32> to vector<16x32xf32>
    %15 = arith.subf %0, %14 : vector<16x32xf32>
    %cst_8 = arith.constant 9.99999974E-6 : f32
    %16 = vector.broadcast %cst_8 : f32 to vector<16x1xf32>
    %17 = arith.addf %13, %16 : vector<16x1xf32>
    %18 = math.rsqrt %17 : vector<16x1xf32>
    %19 = vector.broadcast %18 : vector<16x1xf32> to vector<16x32xf32>
    %20 = arith.mulf %15, %19 : vector<16x32xf32>
    %21 = vector.broadcast %1 : vector<1x32xf32> to vector<16x32xf32>
    %22 = arith.mulf %20, %21 : vector<16x32xf32>
    %23 = vector.broadcast %2 : vector<1x32xf32> to vector<16x32xf32>
    %24 = arith.addf %22, %23 : vector<16x32xf32>
    %c0_9 = arith.constant 0 : index
    %c0_10 = arith.constant 0 : index
    %c0_11 = arith.constant 0 : index
    %25 = vector.load %arg5[%c0_9, %c0_10, %c0_11] : memref<2x32x96xf32, #tpu.memory_space<vmem>>, vector<1x32x96xf32>
    %26 = vector.shape_cast %25 : vector<1x32x96xf32> to vector<32x96xf32>
    %cst_12 = arith.constant dense<0.000000e+00> : vector<16x96xf32>
    %27 = tpu.matmul %24, %26, %cst_12 {dimension_numbers = #tpu.dot_dimension_numbers<[1], [0], [0], [1], [0, 0, 1, 1], [], []>} : vector<16x32xf32>, vector<32x96xf32>, vector<16x96xf32> -> vector<16x96xf32>
    %c0_13 = arith.constant 0 : index
    %c0_14 = arith.constant 0 : index
    %c0_15 = arith.constant 0 : index
    %28 = vector.load %arg6[%c0_13, %c0_14, %c0_15] : memref<2x1x96xf32, #tpu.memory_space<vmem>>, vector<1x1x96xf32>
    %29 = vector.shape_cast %28 : vector<1x1x96xf32> to vector<1x96xf32>
    %30 = vector.broadcast %29 : vector<1x96xf32> to vector<16x96xf32>
    %31 = arith.addf %27, %30 : vector<16x96xf32>
    %c0_16 = arith.constant 0 : index
    %c0_17 = arith.constant 0 : index
    %32 = vector.load %arg1[%c0_16, %c0_17] : memref<2x8xf32, #tpu.memory_space<vmem>>, vector<1x8xf32>
    %33 = vector.extract_strided_slice %31 {offsets = [0, 0], sizes = [8, 16], strides = [1, 1]} : vector<16x96xf32> to vector<8x16xf32>
    %34 = vector.extract_strided_slice %31 {offsets = [0, 32], sizes = [8, 16], strides = [1, 1]} : vector<16x96xf32> to vector<8x16xf32>
    %35 = vector.extract_strided_slice %31 {offsets = [0, 64], sizes = [8, 16], strides = [1, 1]} : vector<16x96xf32> to vector<8x16xf32>
    %cst_18 = arith.constant dense<0.000000e+00> : vector<8x8xf32>
    %36 = tpu.matmul %33, %34, %cst_18 {dimension_numbers = #tpu.dot_dimension_numbers<[1], [1], [0], [0], [0, 0, 1, 0], [], []>} : vector<8x16xf32>, vector<8x16xf32>, vector<8x8xf32> -> vector<8x8xf32>
    %cst_19 = arith.constant 2.500000e-01 : f32
    %37 = vector.broadcast %cst_19 : f32 to vector<8x8xf32>
    %38 = arith.mulf %36, %37 : vector<8x8xf32>
    %39 = vector.broadcast %32 : vector<1x8xf32> to vector<8x8xf32>
    %40 = arith.addf %38, %39 : vector<8x8xf32>
    %cst_20 = arith.constant dense<0xFF800000> : vector<8xf32>
    %41 = vector.multi_reduction <maximumf>, %40, %cst_20 [1] : vector<8x8xf32> to vector<8xf32>
    %42 = vector.shape_cast %41 : vector<8xf32> to vector<8x1xf32>
    %43 = vector.broadcast %42 : vector<8x1xf32> to vector<8x8xf32>
    %44 = arith.subf %40, %43 : vector<8x8xf32>
    %45 = math.exp %44 : vector<8x8xf32>
    %cst_21 = arith.constant dense<0.000000e+00> : vector<8xf32>
    %46 = vector.multi_reduction <add>, %45, %cst_21 [1] : vector<8x8xf32> to vector<8xf32>
    %47 = vector.shape_cast %46 : vector<8xf32> to vector<8x1xf32>
    %48 = tpu.reciprocal %47 {approx = true} : vector<8x1xf32> -> vector<8x1xf32>
    %49 = vector.broadcast %48 : vector<8x1xf32> to vector<8x8xf32>
    %50 = arith.mulf %45, %49 : vector<8x8xf32>
    %cst_22 = arith.constant dense<0.000000e+00> : vector<8x16xf32>
    %51 = tpu.matmul %50, %35, %cst_22 {dimension_numbers = #tpu.dot_dimension_numbers<[1], [0], [0], [1], [0, 0, 1, 1], [], []>} : vector<8x8xf32>, vector<8x16xf32>, vector<8x16xf32> -> vector<8x16xf32>
    %52 = vector.extract_strided_slice %31 {offsets = [0, 16], sizes = [8, 16], strides = [1, 1]} : vector<16x96xf32> to vector<8x16xf32>
    %53 = vector.extract_strided_slice %31 {offsets = [0, 48], sizes = [8, 16], strides = [1, 1]} : vector<16x96xf32> to vector<8x16xf32>
    %54 = vector.extract_strided_slice %31 {offsets = [0, 80], sizes = [8, 16], strides = [1, 1]} : vector<16x96xf32> to vector<8x16xf32>
    %cst_23 = arith.constant dense<0.000000e+00> : vector<8x8xf32>
    %55 = tpu.matmul %52, %53, %cst_23 {dimension_numbers = #tpu.dot_dimension_numbers<[1], [1], [0], [0], [0, 0, 1, 0], [], []>} : vector<8x16xf32>, vector<8x16xf32>, vector<8x8xf32> -> vector<8x8xf32>
    %cst_24 = arith.constant 2.500000e-01 : f32
    %56 = vector.broadcast %cst_24 : f32 to vector<8x8xf32>
    %57 = arith.mulf %55, %56 : vector<8x8xf32>
    %58 = vector.broadcast %32 : vector<1x8xf32> to vector<8x8xf32>
    %59 = arith.addf %57, %58 : vector<8x8xf32>
    %cst_25 = arith.constant dense<0xFF800000> : vector<8xf32>
    %60 = vector.multi_reduction <maximumf>, %59, %cst_25 [1] : vector<8x8xf32> to vector<8xf32>
    %61 = vector.shape_cast %60 : vector<8xf32> to vector<8x1xf32>
    %62 = vector.broadcast %61 : vector<8x1xf32> to vector<8x8xf32>
    %63 = arith.subf %59, %62 : vector<8x8xf32>
    %64 = math.exp %63 : vector<8x8xf32>
    %cst_26 = arith.constant dense<0.000000e+00> : vector<8xf32>
    %65 = vector.multi_reduction <add>, %64, %cst_26 [1] : vector<8x8xf32> to vector<8xf32>
    %66 = vector.shape_cast %65 : vector<8xf32> to vector<8x1xf32>
    %67 = tpu.reciprocal %66 {approx = true} : vector<8x1xf32> -> vector<8x1xf32>
    %68 = vector.broadcast %67 : vector<8x1xf32> to vector<8x8xf32>
    %69 = arith.mulf %64, %68 : vector<8x8xf32>
    %cst_27 = arith.constant dense<0.000000e+00> : vector<8x16xf32>
    %70 = tpu.matmul %69, %54, %cst_27 {dimension_numbers = #tpu.dot_dimension_numbers<[1], [0], [0], [1], [0, 0, 1, 1], [], []>} : vector<8x8xf32>, vector<8x16xf32>, vector<8x16xf32> -> vector<8x16xf32>
    %71 = tpu.concatenate %51, %70 in 1 : vector<8x16xf32>, vector<8x16xf32> -> vector<8x32xf32>
    %c1 = arith.constant 1 : index
    %c0_28 = arith.constant 0 : index
    %72 = vector.load %arg1[%c1, %c0_28] : memref<2x8xf32, #tpu.memory_space<vmem>>, vector<1x8xf32>
    %73 = vector.extract_strided_slice %31 {offsets = [8, 0], sizes = [8, 16], strides = [1, 1]} : vector<16x96xf32> to vector<8x16xf32>
    %74 = vector.extract_strided_slice %31 {offsets = [8, 32], sizes = [8, 16], strides = [1, 1]} : vector<16x96xf32> to vector<8x16xf32>
    %75 = vector.extract_strided_slice %31 {offsets = [8, 64], sizes = [8, 16], strides = [1, 1]} : vector<16x96xf32> to vector<8x16xf32>
    %cst_29 = arith.constant dense<0.000000e+00> : vector<8x8xf32>
    %76 = tpu.matmul %73, %74, %cst_29 {dimension_numbers = #tpu.dot_dimension_numbers<[1], [1], [0], [0], [0, 0, 1, 0], [], []>} : vector<8x16xf32>, vector<8x16xf32>, vector<8x8xf32> -> vector<8x8xf32>
    %cst_30 = arith.constant 2.500000e-01 : f32
    %77 = vector.broadcast %cst_30 : f32 to vector<8x8xf32>
    %78 = arith.mulf %76, %77 : vector<8x8xf32>
    %79 = vector.broadcast %72 : vector<1x8xf32> to vector<8x8xf32>
    %80 = arith.addf %78, %79 : vector<8x8xf32>
    %cst_31 = arith.constant dense<0xFF800000> : vector<8xf32>
    %81 = vector.multi_reduction <maximumf>, %80, %cst_31 [1] : vector<8x8xf32> to vector<8xf32>
    %82 = vector.shape_cast %81 : vector<8xf32> to vector<8x1xf32>
    %83 = vector.broadcast %82 : vector<8x1xf32> to vector<8x8xf32>
    %84 = arith.subf %80, %83 : vector<8x8xf32>
    %85 = math.exp %84 : vector<8x8xf32>
    %cst_32 = arith.constant dense<0.000000e+00> : vector<8xf32>
    %86 = vector.multi_reduction <add>, %85, %cst_32 [1] : vector<8x8xf32> to vector<8xf32>
    %87 = vector.shape_cast %86 : vector<8xf32> to vector<8x1xf32>
    %88 = tpu.reciprocal %87 {approx = true} : vector<8x1xf32> -> vector<8x1xf32>
    %89 = vector.broadcast %88 : vector<8x1xf32> to vector<8x8xf32>
    %90 = arith.mulf %85, %89 : vector<8x8xf32>
    %cst_33 = arith.constant dense<0.000000e+00> : vector<8x16xf32>
    %91 = tpu.matmul %90, %75, %cst_33 {dimension_numbers = #tpu.dot_dimension_numbers<[1], [0], [0], [1], [0, 0, 1, 1], [], []>} : vector<8x8xf32>, vector<8x16xf32>, vector<8x16xf32> -> vector<8x16xf32>
    %92 = vector.extract_strided_slice %31 {offsets = [8, 16], sizes = [8, 16], strides = [1, 1]} : vector<16x96xf32> to vector<8x16xf32>
    %93 = vector.extract_strided_slice %31 {offsets = [8, 48], sizes = [8, 16], strides = [1, 1]} : vector<16x96xf32> to vector<8x16xf32>
    %94 = vector.extract_strided_slice %31 {offsets = [8, 80], sizes = [8, 16], strides = [1, 1]} : vector<16x96xf32> to vector<8x16xf32>
    %cst_34 = arith.constant dense<0.000000e+00> : vector<8x8xf32>
    %95 = tpu.matmul %92, %93, %cst_34 {dimension_numbers = #tpu.dot_dimension_numbers<[1], [1], [0], [0], [0, 0, 1, 0], [], []>} : vector<8x16xf32>, vector<8x16xf32>, vector<8x8xf32> -> vector<8x8xf32>
    %cst_35 = arith.constant 2.500000e-01 : f32
    %96 = vector.broadcast %cst_35 : f32 to vector<8x8xf32>
    %97 = arith.mulf %95, %96 : vector<8x8xf32>
    %98 = vector.broadcast %72 : vector<1x8xf32> to vector<8x8xf32>
    %99 = arith.addf %97, %98 : vector<8x8xf32>
    %cst_36 = arith.constant dense<0xFF800000> : vector<8xf32>
    %100 = vector.multi_reduction <maximumf>, %99, %cst_36 [1] : vector<8x8xf32> to vector<8xf32>
    %101 = vector.shape_cast %100 : vector<8xf32> to vector<8x1xf32>
    %102 = vector.broadcast %101 : vector<8x1xf32> to vector<8x8xf32>
    %103 = arith.subf %99, %102 : vector<8x8xf32>
    %104 = math.exp %103 : vector<8x8xf32>
    %cst_37 = arith.constant dense<0.000000e+00> : vector<8xf32>
    %105 = vector.multi_reduction <add>, %104, %cst_37 [1] : vector<8x8xf32> to vector<8xf32>
    %106 = vector.shape_cast %105 : vector<8xf32> to vector<8x1xf32>
    %107 = tpu.reciprocal %106 {approx = true} : vector<8x1xf32> -> vector<8x1xf32>
    %108 = vector.broadcast %107 : vector<8x1xf32> to vector<8x8xf32>
    %109 = arith.mulf %104, %108 : vector<8x8xf32>
    %cst_38 = arith.constant dense<0.000000e+00> : vector<8x16xf32>
    %110 = tpu.matmul %109, %94, %cst_38 {dimension_numbers = #tpu.dot_dimension_numbers<[1], [0], [0], [1], [0, 0, 1, 1], [], []>} : vector<8x8xf32>, vector<8x16xf32>, vector<8x16xf32> -> vector<8x16xf32>
    %111 = tpu.concatenate %91, %110 in 1 : vector<8x16xf32>, vector<8x16xf32> -> vector<8x32xf32>
    %112 = tpu.concatenate %71, %111 in 0 : vector<8x32xf32>, vector<8x32xf32> -> vector<16x32xf32>
    %c0_39 = arith.constant 0 : index
    %c0_40 = arith.constant 0 : index
    %c0_41 = arith.constant 0 : index
    %113 = vector.load %arg7[%c0_39, %c0_40, %c0_41] : memref<2x32x32xf32, #tpu.memory_space<vmem>>, vector<1x32x32xf32>
    %114 = vector.shape_cast %113 : vector<1x32x32xf32> to vector<32x32xf32>
    %cst_42 = arith.constant dense<0.000000e+00> : vector<16x32xf32>
    %115 = tpu.matmul %112, %114, %cst_42 {dimension_numbers = #tpu.dot_dimension_numbers<[1], [0], [0], [1], [0, 0, 1, 1], [], []>} : vector<16x32xf32>, vector<32x32xf32>, vector<16x32xf32> -> vector<16x32xf32>
    %c0_43 = arith.constant 0 : index
    %c0_44 = arith.constant 0 : index
    %c0_45 = arith.constant 0 : index
    %116 = vector.load %arg8[%c0_43, %c0_44, %c0_45] : memref<2x1x32xf32, #tpu.memory_space<vmem>>, vector<1x1x32xf32>
    %117 = vector.shape_cast %116 : vector<1x1x32xf32> to vector<1x32xf32>
    %118 = vector.broadcast %117 : vector<1x32xf32> to vector<16x32xf32>
    %119 = arith.addf %115, %118 : vector<16x32xf32>
    %120 = arith.addf %24, %119 : vector<16x32xf32>
    %c0_46 = arith.constant 0 : index
    %c0_47 = arith.constant 0 : index
    %c0_48 = arith.constant 0 : index
    %121 = vector.load %arg9[%c0_46, %c0_47, %c0_48] : memref<2x1x32xf32, #tpu.memory_space<vmem>>, vector<1x1x32xf32>
    %122 = vector.shape_cast %121 : vector<1x1x32xf32> to vector<1x32xf32>
    %c0_49 = arith.constant 0 : index
    %c0_50 = arith.constant 0 : index
    %c0_51 = arith.constant 0 : index
    %123 = vector.load %arg10[%c0_49, %c0_50, %c0_51] : memref<2x1x32xf32, #tpu.memory_space<vmem>>, vector<1x1x32xf32>
    %124 = vector.shape_cast %123 : vector<1x1x32xf32> to vector<1x32xf32>
    %cst_52 = arith.constant dense<0.000000e+00> : vector<16xf32>
    %125 = vector.multi_reduction <add>, %120, %cst_52 [1] : vector<16x32xf32> to vector<16xf32>
    %126 = vector.shape_cast %125 : vector<16xf32> to vector<16x1xf32>
    %cst_53 = arith.constant 3.200000e+01 : f32
    %127 = vector.broadcast %cst_53 : f32 to vector<16x1xf32>
    %128 = arith.divf %126, %127 : vector<16x1xf32>
    %129 = vector.broadcast %128 : vector<16x1xf32> to vector<16x32xf32>
    %130 = arith.subf %120, %129 : vector<16x32xf32>
    %131 = arith.mulf %130, %130 : vector<16x32xf32>
    %cst_54 = arith.constant dense<0.000000e+00> : vector<16xf32>
    %132 = vector.multi_reduction <add>, %131, %cst_54 [1] : vector<16x32xf32> to vector<16xf32>
    %133 = vector.shape_cast %132 : vector<16xf32> to vector<16x1xf32>
    %cst_55 = arith.constant 3.200000e+01 : f32
    %134 = vector.broadcast %cst_55 : f32 to vector<16x1xf32>
    %135 = arith.divf %133, %134 : vector<16x1xf32>
    %136 = vector.broadcast %128 : vector<16x1xf32> to vector<16x32xf32>
    %137 = arith.subf %120, %136 : vector<16x32xf32>
    %cst_56 = arith.constant 9.99999974E-6 : f32
    %138 = vector.broadcast %cst_56 : f32 to vector<16x1xf32>
    %139 = arith.addf %135, %138 : vector<16x1xf32>
    %140 = math.rsqrt %139 : vector<16x1xf32>
    %141 = vector.broadcast %140 : vector<16x1xf32> to vector<16x32xf32>
    %142 = arith.mulf %137, %141 : vector<16x32xf32>
    %143 = vector.broadcast %122 : vector<1x32xf32> to vector<16x32xf32>
    %144 = arith.mulf %142, %143 : vector<16x32xf32>
    %145 = vector.broadcast %124 : vector<1x32xf32> to vector<16x32xf32>
    %146 = arith.addf %144, %145 : vector<16x32xf32>
    %c0_57 = arith.constant 0 : index
    %c0_58 = arith.constant 0 : index
    %c0_59 = arith.constant 0 : index
    %147 = vector.load %arg11[%c0_57, %c0_58, %c0_59] : memref<2x32x128xf32, #tpu.memory_space<vmem>>, vector<1x32x128xf32>
    %148 = vector.shape_cast %147 : vector<1x32x128xf32> to vector<32x128xf32>
    %cst_60 = arith.constant dense<0.000000e+00> : vector<16x128xf32>
    %149 = tpu.matmul %146, %148, %cst_60 {dimension_numbers = #tpu.dot_dimension_numbers<[1], [0], [0], [1], [0, 0, 1, 1], [], []>} : vector<16x32xf32>, vector<32x128xf32>, vector<16x128xf32> -> vector<16x128xf32>
    %c0_61 = arith.constant 0 : index
    %c0_62 = arith.constant 0 : index
    %c0_63 = arith.constant 0 : index
    %150 = vector.load %arg12[%c0_61, %c0_62, %c0_63] : memref<2x1x128xf32, #tpu.memory_space<vmem>>, vector<1x1x128xf32>
    %151 = vector.shape_cast %150 : vector<1x1x128xf32> to vector<1x128xf32>
    %152 = vector.broadcast %151 : vector<1x128xf32> to vector<16x128xf32>
    %153 = arith.addf %149, %152 : vector<16x128xf32>
    %154 = arith.mulf %153, %153 : vector<16x128xf32>
    %155 = arith.mulf %153, %154 : vector<16x128xf32>
    %cst_64 = arith.constant 4.471500e-02 : f32
    %156 = vector.broadcast %cst_64 : f32 to vector<16x128xf32>
    %157 = arith.mulf %156, %155 : vector<16x128xf32>
    %158 = arith.addf %153, %157 : vector<16x128xf32>
    %cst_65 = arith.constant 0.797884583 : f32
    %159 = vector.broadcast %cst_65 : f32 to vector<16x128xf32>
    %160 = arith.mulf %159, %158 : vector<16x128xf32>
    %161 = math.tanh %160 : vector<16x128xf32>
    %cst_66 = arith.constant 1.000000e+00 : f32
    %162 = vector.broadcast %cst_66 : f32 to vector<16x128xf32>
    %163 = arith.addf %162, %161 : vector<16x128xf32>
    %cst_67 = arith.constant 5.000000e-01 : f32
    %164 = vector.broadcast %cst_67 : f32 to vector<16x128xf32>
    %165 = arith.mulf %164, %163 : vector<16x128xf32>
    %166 = arith.mulf %153, %165 : vector<16x128xf32>
    %c0_68 = arith.constant 0 : index
    %c0_69 = arith.constant 0 : index
    %c0_70 = arith.constant 0 : index
    %167 = vector.load %arg13[%c0_68, %c0_69, %c0_70] : memref<2x128x32xf32, #tpu.memory_space<vmem>>, vector<1x128x32xf32>
    %168 = vector.shape_cast %167 : vector<1x128x32xf32> to vector<128x32xf32>
    %cst_71 = arith.constant dense<0.000000e+00> : vector<16x32xf32>
    %169 = tpu.matmul %166, %168, %cst_71 {dimension_numbers = #tpu.dot_dimension_numbers<[1], [0], [0], [1], [0, 0, 1, 1], [], []>} : vector<16x128xf32>, vector<128x32xf32>, vector<16x32xf32> -> vector<16x32xf32>
    %c0_72 = arith.constant 0 : index
    %c0_73 = arith.constant 0 : index
    %c0_74 = arith.constant 0 : index
    %170 = vector.load %arg14[%c0_72, %c0_73, %c0_74] : memref<2x1x32xf32, #tpu.memory_space<vmem>>, vector<1x1x32xf32>
    %171 = vector.shape_cast %170 : vector<1x1x32xf32> to vector<1x32xf32>
    %172 = vector.broadcast %171 : vector<1x32xf32> to vector<16x32xf32>
    %173 = arith.addf %169, %172 : vector<16x32xf32>
    %174 = arith.addf %146, %173 : vector<16x32xf32>
    %c0_75 = arith.constant 0 : index
    %c0_76 = arith.constant 0 : index
    %c0_77 = arith.constant 0 : index
    %175 = vector.load %arg15[%c0_75, %c0_76, %c0_77] : memref<2x1x32xf32, #tpu.memory_space<vmem>>, vector<1x1x32xf32>
    %176 = vector.shape_cast %175 : vector<1x1x32xf32> to vector<1x32xf32>
    %c0_78 = arith.constant 0 : index
    %c0_79 = arith.constant 0 : index
    %c0_80 = arith.constant 0 : index
    %177 = vector.load %arg16[%c0_78, %c0_79, %c0_80] : memref<2x1x32xf32, #tpu.memory_space<vmem>>, vector<1x1x32xf32>
    %178 = vector.shape_cast %177 : vector<1x1x32xf32> to vector<1x32xf32>
    %cst_81 = arith.constant dense<0.000000e+00> : vector<16xf32>
    %179 = vector.multi_reduction <add>, %174, %cst_81 [1] : vector<16x32xf32> to vector<16xf32>
    %180 = vector.shape_cast %179 : vector<16xf32> to vector<16x1xf32>
    %cst_82 = arith.constant 3.200000e+01 : f32
    %181 = vector.broadcast %cst_82 : f32 to vector<16x1xf32>
    %182 = arith.divf %180, %181 : vector<16x1xf32>
    %183 = vector.broadcast %182 : vector<16x1xf32> to vector<16x32xf32>
    %184 = arith.subf %174, %183 : vector<16x32xf32>
    %185 = arith.mulf %184, %184 : vector<16x32xf32>
    %cst_83 = arith.constant dense<0.000000e+00> : vector<16xf32>
    %186 = vector.multi_reduction <add>, %185, %cst_83 [1] : vector<16x32xf32> to vector<16xf32>
    %187 = vector.shape_cast %186 : vector<16xf32> to vector<16x1xf32>
    %cst_84 = arith.constant 3.200000e+01 : f32
    %188 = vector.broadcast %cst_84 : f32 to vector<16x1xf32>
    %189 = arith.divf %187, %188 : vector<16x1xf32>
    %190 = vector.broadcast %182 : vector<16x1xf32> to vector<16x32xf32>
    %191 = arith.subf %174, %190 : vector<16x32xf32>
    %cst_85 = arith.constant 9.99999974E-6 : f32
    %192 = vector.broadcast %cst_85 : f32 to vector<16x1xf32>
    %193 = arith.addf %189, %192 : vector<16x1xf32>
    %194 = math.rsqrt %193 : vector<16x1xf32>
    %195 = vector.broadcast %194 : vector<16x1xf32> to vector<16x32xf32>
    %196 = arith.mulf %191, %195 : vector<16x32xf32>
    %197 = vector.broadcast %176 : vector<1x32xf32> to vector<16x32xf32>
    %198 = arith.mulf %196, %197 : vector<16x32xf32>
    %199 = vector.broadcast %178 : vector<1x32xf32> to vector<16x32xf32>
    %200 = arith.addf %198, %199 : vector<16x32xf32>
    %c1_86 = arith.constant 1 : index
    %c0_87 = arith.constant 0 : index
    %c0_88 = arith.constant 0 : index
    %201 = vector.load %arg5[%c1_86, %c0_87, %c0_88] : memref<2x32x96xf32, #tpu.memory_space<vmem>>, vector<1x32x96xf32>
    %202 = vector.shape_cast %201 : vector<1x32x96xf32> to vector<32x96xf32>
    %cst_89 = arith.constant dense<0.000000e+00> : vector<16x96xf32>
    %203 = tpu.matmul %200, %202, %cst_89 {dimension_numbers = #tpu.dot_dimension_numbers<[1], [0], [0], [1], [0, 0, 1, 1], [], []>} : vector<16x32xf32>, vector<32x96xf32>, vector<16x96xf32> -> vector<16x96xf32>
    %c1_90 = arith.constant 1 : index
    %c0_91 = arith.constant 0 : index
    %c0_92 = arith.constant 0 : index
    %204 = vector.load %arg6[%c1_90, %c0_91, %c0_92] : memref<2x1x96xf32, #tpu.memory_space<vmem>>, vector<1x1x96xf32>
    %205 = vector.shape_cast %204 : vector<1x1x96xf32> to vector<1x96xf32>
    %206 = vector.broadcast %205 : vector<1x96xf32> to vector<16x96xf32>
    %207 = arith.addf %203, %206 : vector<16x96xf32>
    %c0_93 = arith.constant 0 : index
    %c0_94 = arith.constant 0 : index
    %208 = vector.load %arg1[%c0_93, %c0_94] : memref<2x8xf32, #tpu.memory_space<vmem>>, vector<1x8xf32>
    %209 = vector.extract_strided_slice %207 {offsets = [0, 0], sizes = [8, 16], strides = [1, 1]} : vector<16x96xf32> to vector<8x16xf32>
    %210 = vector.extract_strided_slice %207 {offsets = [0, 32], sizes = [8, 16], strides = [1, 1]} : vector<16x96xf32> to vector<8x16xf32>
    %211 = vector.extract_strided_slice %207 {offsets = [0, 64], sizes = [8, 16], strides = [1, 1]} : vector<16x96xf32> to vector<8x16xf32>
    %cst_95 = arith.constant dense<0.000000e+00> : vector<8x8xf32>
    %212 = tpu.matmul %209, %210, %cst_95 {dimension_numbers = #tpu.dot_dimension_numbers<[1], [1], [0], [0], [0, 0, 1, 0], [], []>} : vector<8x16xf32>, vector<8x16xf32>, vector<8x8xf32> -> vector<8x8xf32>
    %cst_96 = arith.constant 2.500000e-01 : f32
    %213 = vector.broadcast %cst_96 : f32 to vector<8x8xf32>
    %214 = arith.mulf %212, %213 : vector<8x8xf32>
    %215 = vector.broadcast %208 : vector<1x8xf32> to vector<8x8xf32>
    %216 = arith.addf %214, %215 : vector<8x8xf32>
    %cst_97 = arith.constant dense<0xFF800000> : vector<8xf32>
    %217 = vector.multi_reduction <maximumf>, %216, %cst_97 [1] : vector<8x8xf32> to vector<8xf32>
    %218 = vector.shape_cast %217 : vector<8xf32> to vector<8x1xf32>
    %219 = vector.broadcast %218 : vector<8x1xf32> to vector<8x8xf32>
    %220 = arith.subf %216, %219 : vector<8x8xf32>
    %221 = math.exp %220 : vector<8x8xf32>
    %cst_98 = arith.constant dense<0.000000e+00> : vector<8xf32>
    %222 = vector.multi_reduction <add>, %221, %cst_98 [1] : vector<8x8xf32> to vector<8xf32>
    %223 = vector.shape_cast %222 : vector<8xf32> to vector<8x1xf32>
    %224 = tpu.reciprocal %223 {approx = true} : vector<8x1xf32> -> vector<8x1xf32>
    %225 = vector.broadcast %224 : vector<8x1xf32> to vector<8x8xf32>
    %226 = arith.mulf %221, %225 : vector<8x8xf32>
    %cst_99 = arith.constant dense<0.000000e+00> : vector<8x16xf32>
    %227 = tpu.matmul %226, %211, %cst_99 {dimension_numbers = #tpu.dot_dimension_numbers<[1], [0], [0], [1], [0, 0, 1, 1], [], []>} : vector<8x8xf32>, vector<8x16xf32>, vector<8x16xf32> -> vector<8x16xf32>
    %228 = vector.extract_strided_slice %207 {offsets = [0, 16], sizes = [8, 16], strides = [1, 1]} : vector<16x96xf32> to vector<8x16xf32>
    %229 = vector.extract_strided_slice %207 {offsets = [0, 48], sizes = [8, 16], strides = [1, 1]} : vector<16x96xf32> to vector<8x16xf32>
    %230 = vector.extract_strided_slice %207 {offsets = [0, 80], sizes = [8, 16], strides = [1, 1]} : vector<16x96xf32> to vector<8x16xf32>
    %cst_100 = arith.constant dense<0.000000e+00> : vector<8x8xf32>
    %231 = tpu.matmul %228, %229, %cst_100 {dimension_numbers = #tpu.dot_dimension_numbers<[1], [1], [0], [0], [0, 0, 1, 0], [], []>} : vector<8x16xf32>, vector<8x16xf32>, vector<8x8xf32> -> vector<8x8xf32>
    %cst_101 = arith.constant 2.500000e-01 : f32
    %232 = vector.broadcast %cst_101 : f32 to vector<8x8xf32>
    %233 = arith.mulf %231, %232 : vector<8x8xf32>
    %234 = vector.broadcast %208 : vector<1x8xf32> to vector<8x8xf32>
    %235 = arith.addf %233, %234 : vector<8x8xf32>
    %cst_102 = arith.constant dense<0xFF800000> : vector<8xf32>
    %236 = vector.multi_reduction <maximumf>, %235, %cst_102 [1] : vector<8x8xf32> to vector<8xf32>
    %237 = vector.shape_cast %236 : vector<8xf32> to vector<8x1xf32>
    %238 = vector.broadcast %237 : vector<8x1xf32> to vector<8x8xf32>
    %239 = arith.subf %235, %238 : vector<8x8xf32>
    %240 = math.exp %239 : vector<8x8xf32>
    %cst_103 = arith.constant dense<0.000000e+00> : vector<8xf32>
    %241 = vector.multi_reduction <add>, %240, %cst_103 [1] : vector<8x8xf32> to vector<8xf32>
    %242 = vector.shape_cast %241 : vector<8xf32> to vector<8x1xf32>
    %243 = tpu.reciprocal %242 {approx = true} : vector<8x1xf32> -> vector<8x1xf32>
    %244 = vector.broadcast %243 : vector<8x1xf32> to vector<8x8xf32>
    %245 = arith.mulf %240, %244 : vector<8x8xf32>
    %cst_104 = arith.constant dense<0.000000e+00> : vector<8x16xf32>
    %246 = tpu.matmul %245, %230, %cst_104 {dimension_numbers = #tpu.dot_dimension_numbers<[1], [0], [0], [1], [0, 0, 1, 1], [], []>} : vector<8x8xf32>, vector<8x16xf32>, vector<8x16xf32> -> vector<8x16xf32>
    %247 = tpu.concatenate %227, %246 in 1 : vector<8x16xf32>, vector<8x16xf32> -> vector<8x32xf32>
    %c1_105 = arith.constant 1 : index
    %c0_106 = arith.constant 0 : index
    %248 = vector.load %arg1[%c1_105, %c0_106] : memref<2x8xf32, #tpu.memory_space<vmem>>, vector<1x8xf32>
    %249 = vector.extract_strided_slice %207 {offsets = [8, 0], sizes = [8, 16], strides = [1, 1]} : vector<16x96xf32> to vector<8x16xf32>
    %250 = vector.extract_strided_slice %207 {offsets = [8, 32], sizes = [8, 16], strides = [1, 1]} : vector<16x96xf32> to vector<8x16xf32>
    %251 = vector.extract_strided_slice %207 {offsets = [8, 64], sizes = [8, 16], strides = [1, 1]} : vector<16x96xf32> to vector<8x16xf32>
    %cst_107 = arith.constant dense<0.000000e+00> : vector<8x8xf32>
    %252 = tpu.matmul %249, %250, %cst_107 {dimension_numbers = #tpu.dot_dimension_numbers<[1], [1], [0], [0], [0, 0, 1, 0], [], []>} : vector<8x16xf32>, vector<8x16xf32>, vector<8x8xf32> -> vector<8x8xf32>
    %cst_108 = arith.constant 2.500000e-01 : f32
    %253 = vector.broadcast %cst_108 : f32 to vector<8x8xf32>
    %254 = arith.mulf %252, %253 : vector<8x8xf32>
    %255 = vector.broadcast %248 : vector<1x8xf32> to vector<8x8xf32>
    %256 = arith.addf %254, %255 : vector<8x8xf32>
    %cst_109 = arith.constant dense<0xFF800000> : vector<8xf32>
    %257 = vector.multi_reduction <maximumf>, %256, %cst_109 [1] : vector<8x8xf32> to vector<8xf32>
    %258 = vector.shape_cast %257 : vector<8xf32> to vector<8x1xf32>
    %259 = vector.broadcast %258 : vector<8x1xf32> to vector<8x8xf32>
    %260 = arith.subf %256, %259 : vector<8x8xf32>
    %261 = math.exp %260 : vector<8x8xf32>
    %cst_110 = arith.constant dense<0.000000e+00> : vector<8xf32>
    %262 = vector.multi_reduction <add>, %261, %cst_110 [1] : vector<8x8xf32> to vector<8xf32>
    %263 = vector.shape_cast %262 : vector<8xf32> to vector<8x1xf32>
    %264 = tpu.reciprocal %263 {approx = true} : vector<8x1xf32> -> vector<8x1xf32>
    %265 = vector.broadcast %264 : vector<8x1xf32> to vector<8x8xf32>
    %266 = arith.mulf %261, %265 : vector<8x8xf32>
    %cst_111 = arith.constant dense<0.000000e+00> : vector<8x16xf32>
    %267 = tpu.matmul %266, %251, %cst_111 {dimension_numbers = #tpu.dot_dimension_numbers<[1], [0], [0], [1], [0, 0, 1, 1], [], []>} : vector<8x8xf32>, vector<8x16xf32>, vector<8x16xf32> -> vector<8x16xf32>
    %268 = vector.extract_strided_slice %207 {offsets = [8, 16], sizes = [8, 16], strides = [1, 1]} : vector<16x96xf32> to vector<8x16xf32>
    %269 = vector.extract_strided_slice %207 {offsets = [8, 48], sizes = [8, 16], strides = [1, 1]} : vector<16x96xf32> to vector<8x16xf32>
    %270 = vector.extract_strided_slice %207 {offsets = [8, 80], sizes = [8, 16], strides = [1, 1]} : vector<16x96xf32> to vector<8x16xf32>
    %cst_112 = arith.constant dense<0.000000e+00> : vector<8x8xf32>
    %271 = tpu.matmul %268, %269, %cst_112 {dimension_numbers = #tpu.dot_dimension_numbers<[1], [1], [0], [0], [0, 0, 1, 0], [], []>} : vector<8x16xf32>, vector<8x16xf32>, vector<8x8xf32> -> vector<8x8xf32>
    %cst_113 = arith.constant 2.500000e-01 : f32
    %272 = vector.broadcast %cst_113 : f32 to vector<8x8xf32>
    %273 = arith.mulf %271, %272 : vector<8x8xf32>
    %274 = vector.broadcast %248 : vector<1x8xf32> to vector<8x8xf32>
    %275 = arith.addf %273, %274 : vector<8x8xf32>
    %cst_114 = arith.constant dense<0xFF800000> : vector<8xf32>
    %276 = vector.multi_reduction <maximumf>, %275, %cst_114 [1] : vector<8x8xf32> to vector<8xf32>
    %277 = vector.shape_cast %276 : vector<8xf32> to vector<8x1xf32>
    %278 = vector.broadcast %277 : vector<8x1xf32> to vector<8x8xf32>
    %279 = arith.subf %275, %278 : vector<8x8xf32>
    %280 = math.exp %279 : vector<8x8xf32>
    %cst_115 = arith.constant dense<0.000000e+00> : vector<8xf32>
    %281 = vector.multi_reduction <add>, %280, %cst_115 [1] : vector<8x8xf32> to vector<8xf32>
    %282 = vector.shape_cast %281 : vector<8xf32> to vector<8x1xf32>
    %283 = tpu.reciprocal %282 {approx = true} : vector<8x1xf32> -> vector<8x1xf32>
    %284 = vector.broadcast %283 : vector<8x1xf32> to vector<8x8xf32>
    %285 = arith.mulf %280, %284 : vector<8x8xf32>
    %cst_116 = arith.constant dense<0.000000e+00> : vector<8x16xf32>
    %286 = tpu.matmul %285, %270, %cst_116 {dimension_numbers = #tpu.dot_dimension_numbers<[1], [0], [0], [1], [0, 0, 1, 1], [], []>} : vector<8x8xf32>, vector<8x16xf32>, vector<8x16xf32> -> vector<8x16xf32>
    %287 = tpu.concatenate %267, %286 in 1 : vector<8x16xf32>, vector<8x16xf32> -> vector<8x32xf32>
    %288 = tpu.concatenate %247, %287 in 0 : vector<8x32xf32>, vector<8x32xf32> -> vector<16x32xf32>
    %c1_117 = arith.constant 1 : index
    %c0_118 = arith.constant 0 : index
    %c0_119 = arith.constant 0 : index
    %289 = vector.load %arg7[%c1_117, %c0_118, %c0_119] : memref<2x32x32xf32, #tpu.memory_space<vmem>>, vector<1x32x32xf32>
    %290 = vector.shape_cast %289 : vector<1x32x32xf32> to vector<32x32xf32>
    %cst_120 = arith.constant dense<0.000000e+00> : vector<16x32xf32>
    %291 = tpu.matmul %288, %290, %cst_120 {dimension_numbers = #tpu.dot_dimension_numbers<[1], [0], [0], [1], [0, 0, 1, 1], [], []>} : vector<16x32xf32>, vector<32x32xf32>, vector<16x32xf32> -> vector<16x32xf32>
    %c1_121 = arith.constant 1 : index
    %c0_122 = arith.constant 0 : index
    %c0_123 = arith.constant 0 : index
    %292 = vector.load %arg8[%c1_121, %c0_122, %c0_123] : memref<2x1x32xf32, #tpu.memory_space<vmem>>, vector<1x1x32xf32>
    %293 = vector.shape_cast %292 : vector<1x1x32xf32> to vector<1x32xf32>
    %294 = vector.broadcast %293 : vector<1x32xf32> to vector<16x32xf32>
    %295 = arith.addf %291, %294 : vector<16x32xf32>
    %296 = arith.addf %200, %295 : vector<16x32xf32>
    %c1_124 = arith.constant 1 : index
    %c0_125 = arith.constant 0 : index
    %c0_126 = arith.constant 0 : index
    %297 = vector.load %arg9[%c1_124, %c0_125, %c0_126] : memref<2x1x32xf32, #tpu.memory_space<vmem>>, vector<1x1x32xf32>
    %298 = vector.shape_cast %297 : vector<1x1x32xf32> to vector<1x32xf32>
    %c1_127 = arith.constant 1 : index
    %c0_128 = arith.constant 0 : index
    %c0_129 = arith.constant 0 : index
    %299 = vector.load %arg10[%c1_127, %c0_128, %c0_129] : memref<2x1x32xf32, #tpu.memory_space<vmem>>, vector<1x1x32xf32>
    %300 = vector.shape_cast %299 : vector<1x1x32xf32> to vector<1x32xf32>
    %cst_130 = arith.constant dense<0.000000e+00> : vector<16xf32>
    %301 = vector.multi_reduction <add>, %296, %cst_130 [1] : vector<16x32xf32> to vector<16xf32>
    %302 = vector.shape_cast %301 : vector<16xf32> to vector<16x1xf32>
    %cst_131 = arith.constant 3.200000e+01 : f32
    %303 = vector.broadcast %cst_131 : f32 to vector<16x1xf32>
    %304 = arith.divf %302, %303 : vector<16x1xf32>
    %305 = vector.broadcast %304 : vector<16x1xf32> to vector<16x32xf32>
    %306 = arith.subf %296, %305 : vector<16x32xf32>
    %307 = arith.mulf %306, %306 : vector<16x32xf32>
    %cst_132 = arith.constant dense<0.000000e+00> : vector<16xf32>
    %308 = vector.multi_reduction <add>, %307, %cst_132 [1] : vector<16x32xf32> to vector<16xf32>
    %309 = vector.shape_cast %308 : vector<16xf32> to vector<16x1xf32>
    %cst_133 = arith.constant 3.200000e+01 : f32
    %310 = vector.broadcast %cst_133 : f32 to vector<16x1xf32>
    %311 = arith.divf %309, %310 : vector<16x1xf32>
    %312 = vector.broadcast %304 : vector<16x1xf32> to vector<16x32xf32>
    %313 = arith.subf %296, %312 : vector<16x32xf32>
    %cst_134 = arith.constant 9.99999974E-6 : f32
    %314 = vector.broadcast %cst_134 : f32 to vector<16x1xf32>
    %315 = arith.addf %311, %314 : vector<16x1xf32>
    %316 = math.rsqrt %315 : vector<16x1xf32>
    %317 = vector.broadcast %316 : vector<16x1xf32> to vector<16x32xf32>
    %318 = arith.mulf %313, %317 : vector<16x32xf32>
    %319 = vector.broadcast %298 : vector<1x32xf32> to vector<16x32xf32>
    %320 = arith.mulf %318, %319 : vector<16x32xf32>
    %321 = vector.broadcast %300 : vector<1x32xf32> to vector<16x32xf32>
    %322 = arith.addf %320, %321 : vector<16x32xf32>
    %c1_135 = arith.constant 1 : index
    %c0_136 = arith.constant 0 : index
    %c0_137 = arith.constant 0 : index
    %323 = vector.load %arg11[%c1_135, %c0_136, %c0_137] : memref<2x32x128xf32, #tpu.memory_space<vmem>>, vector<1x32x128xf32>
    %324 = vector.shape_cast %323 : vector<1x32x128xf32> to vector<32x128xf32>
    %cst_138 = arith.constant dense<0.000000e+00> : vector<16x128xf32>
    %325 = tpu.matmul %322, %324, %cst_138 {dimension_numbers = #tpu.dot_dimension_numbers<[1], [0], [0], [1], [0, 0, 1, 1], [], []>} : vector<16x32xf32>, vector<32x128xf32>, vector<16x128xf32> -> vector<16x128xf32>
    %c1_139 = arith.constant 1 : index
    %c0_140 = arith.constant 0 : index
    %c0_141 = arith.constant 0 : index
    %326 = vector.load %arg12[%c1_139, %c0_140, %c0_141] : memref<2x1x128xf32, #tpu.memory_space<vmem>>, vector<1x1x128xf32>
    %327 = vector.shape_cast %326 : vector<1x1x128xf32> to vector<1x128xf32>
    %328 = vector.broadcast %327 : vector<1x128xf32> to vector<16x128xf32>
    %329 = arith.addf %325, %328 : vector<16x128xf32>
    %330 = arith.mulf %329, %329 : vector<16x128xf32>
    %331 = arith.mulf %329, %330 : vector<16x128xf32>
    %cst_142 = arith.constant 4.471500e-02 : f32
    %332 = vector.broadcast %cst_142 : f32 to vector<16x128xf32>
    %333 = arith.mulf %332, %331 : vector<16x128xf32>
    %334 = arith.addf %329, %333 : vector<16x128xf32>
    %cst_143 = arith.constant 0.797884583 : f32
    %335 = vector.broadcast %cst_143 : f32 to vector<16x128xf32>
    %336 = arith.mulf %335, %334 : vector<16x128xf32>
    %337 = math.tanh %336 : vector<16x128xf32>
    %cst_144 = arith.constant 1.000000e+00 : f32
    %338 = vector.broadcast %cst_144 : f32 to vector<16x128xf32>
    %339 = arith.addf %338, %337 : vector<16x128xf32>
    %cst_145 = arith.constant 5.000000e-01 : f32
    %340 = vector.broadcast %cst_145 : f32 to vector<16x128xf32>
    %341 = arith.mulf %340, %339 : vector<16x128xf32>
    %342 = arith.mulf %329, %341 : vector<16x128xf32>
    %c1_146 = arith.constant 1 : index
    %c0_147 = arith.constant 0 : index
    %c0_148 = arith.constant 0 : index
    %343 = vector.load %arg13[%c1_146, %c0_147, %c0_148] : memref<2x128x32xf32, #tpu.memory_space<vmem>>, vector<1x128x32xf32>
    %344 = vector.shape_cast %343 : vector<1x128x32xf32> to vector<128x32xf32>
    %cst_149 = arith.constant dense<0.000000e+00> : vector<16x32xf32>
    %345 = tpu.matmul %342, %344, %cst_149 {dimension_numbers = #tpu.dot_dimension_numbers<[1], [0], [0], [1], [0, 0, 1, 1], [], []>} : vector<16x128xf32>, vector<128x32xf32>, vector<16x32xf32> -> vector<16x32xf32>
    %c1_150 = arith.constant 1 : index
    %c0_151 = arith.constant 0 : index
    %c0_152 = arith.constant 0 : index
    %346 = vector.load %arg14[%c1_150, %c0_151, %c0_152] : memref<2x1x32xf32, #tpu.memory_space<vmem>>, vector<1x1x32xf32>
    %347 = vector.shape_cast %346 : vector<1x1x32xf32> to vector<1x32xf32>
    %348 = vector.broadcast %347 : vector<1x32xf32> to vector<16x32xf32>
    %349 = arith.addf %345, %348 : vector<16x32xf32>
    %350 = arith.addf %322, %349 : vector<16x32xf32>
    %c1_153 = arith.constant 1 : index
    %c0_154 = arith.constant 0 : index
    %c0_155 = arith.constant 0 : index
    %351 = vector.load %arg15[%c1_153, %c0_154, %c0_155] : memref<2x1x32xf32, #tpu.memory_space<vmem>>, vector<1x1x32xf32>
    %352 = vector.shape_cast %351 : vector<1x1x32xf32> to vector<1x32xf32>
    %c1_156 = arith.constant 1 : index
    %c0_157 = arith.constant 0 : index
    %c0_158 = arith.constant 0 : index
    %353 = vector.load %arg16[%c1_156, %c0_157, %c0_158] : memref<2x1x32xf32, #tpu.memory_space<vmem>>, vector<1x1x32xf32>
    %354 = vector.shape_cast %353 : vector<1x1x32xf32> to vector<1x32xf32>
    %cst_159 = arith.constant dense<0.000000e+00> : vector<16xf32>
    %355 = vector.multi_reduction <add>, %350, %cst_159 [1] : vector<16x32xf32> to vector<16xf32>
    %356 = vector.shape_cast %355 : vector<16xf32> to vector<16x1xf32>
    %cst_160 = arith.constant 3.200000e+01 : f32
    %357 = vector.broadcast %cst_160 : f32 to vector<16x1xf32>
    %358 = arith.divf %356, %357 : vector<16x1xf32>
    %359 = vector.broadcast %358 : vector<16x1xf32> to vector<16x32xf32>
    %360 = arith.subf %350, %359 : vector<16x32xf32>
    %361 = arith.mulf %360, %360 : vector<16x32xf32>
    %cst_161 = arith.constant dense<0.000000e+00> : vector<16xf32>
    %362 = vector.multi_reduction <add>, %361, %cst_161 [1] : vector<16x32xf32> to vector<16xf32>
    %363 = vector.shape_cast %362 : vector<16xf32> to vector<16x1xf32>
    %cst_162 = arith.constant 3.200000e+01 : f32
    %364 = vector.broadcast %cst_162 : f32 to vector<16x1xf32>
    %365 = arith.divf %363, %364 : vector<16x1xf32>
    %366 = vector.broadcast %358 : vector<16x1xf32> to vector<16x32xf32>
    %367 = arith.subf %350, %366 : vector<16x32xf32>
    %cst_163 = arith.constant 9.99999974E-6 : f32
    %368 = vector.broadcast %cst_163 : f32 to vector<16x1xf32>
    %369 = arith.addf %365, %368 : vector<16x1xf32>
    %370 = math.rsqrt %369 : vector<16x1xf32>
    %371 = vector.broadcast %370 : vector<16x1xf32> to vector<16x32xf32>
    %372 = arith.mulf %367, %371 : vector<16x32xf32>
    %373 = vector.broadcast %352 : vector<1x32xf32> to vector<16x32xf32>
    %374 = arith.mulf %372, %373 : vector<16x32xf32>
    %375 = vector.broadcast %354 : vector<1x32xf32> to vector<16x32xf32>
    %376 = arith.addf %374, %375 : vector<16x32xf32>
    %377 = vector.extract_strided_slice %376 {offsets = [0, 0], sizes = [1, 32], strides = [1, 1]} : vector<16x32xf32> to vector<1x32xf32>
    %378 = vector.extract_strided_slice %376 {offsets = [8, 0], sizes = [1, 32], strides = [1, 1]} : vector<16x32xf32> to vector<1x32xf32>
    %379 = tpu.concatenate %377, %378 in 0 : vector<1x32xf32>, vector<1x32xf32> -> vector<2x32xf32>
    %c0_164 = arith.constant 0 : index
    %c0_165 = arith.constant 0 : index
    %380 = vector.load %arg2[%c0_164, %c0_165] : memref<2x64xf32, #tpu.memory_space<vmem>>, vector<2x64xf32>
    %c0_166 = arith.constant 0 : index
    %c0_167 = arith.constant 0 : index
    %381 = vector.load %arg17[%c0_166, %c0_167] : memref<64x64xf32, #tpu.memory_space<vmem>>, vector<64x64xf32>
    %cst_168 = arith.constant dense<0.000000e+00> : vector<2x64xf32>
    %382 = tpu.matmul %380, %381, %cst_168 {dimension_numbers = #tpu.dot_dimension_numbers<[1], [0], [0], [1], [0, 0, 1, 1], [], []>} : vector<2x64xf32>, vector<64x64xf32>, vector<2x64xf32> -> vector<2x64xf32>
    %c0_169 = arith.constant 0 : index
    %c0_170 = arith.constant 0 : index
    %383 = vector.load %arg18[%c0_169, %c0_170] : memref<1x64xf32, #tpu.memory_space<vmem>>, vector<1x64xf32>
    %384 = vector.broadcast %383 : vector<1x64xf32> to vector<2x64xf32>
    %385 = arith.addf %382, %384 : vector<2x64xf32>
    %cst_171 = arith.constant 0.000000e+00 : f32
    %386 = vector.broadcast %cst_171 : f32 to vector<2x64xf32>
    %387 = arith.maximumf %385, %386 : vector<2x64xf32>
    %388 = tpu.concatenate %379, %387 in 1 : vector<2x32xf32>, vector<2x64xf32> -> vector<2x96xf32>
    %c0_172 = arith.constant 0 : index
    %c0_173 = arith.constant 0 : index
    %389 = vector.load %arg19[%c0_172, %c0_173] : memref<96x128xf32, #tpu.memory_space<vmem>>, vector<96x128xf32>
    %cst_174 = arith.constant dense<0.000000e+00> : vector<2x128xf32>
    %390 = tpu.matmul %388, %389, %cst_174 {dimension_numbers = #tpu.dot_dimension_numbers<[1], [0], [0], [1], [0, 0, 1, 1], [], []>} : vector<2x96xf32>, vector<96x128xf32>, vector<2x128xf32> -> vector<2x128xf32>
    %c0_175 = arith.constant 0 : index
    %c0_176 = arith.constant 0 : index
    %391 = vector.load %arg20[%c0_175, %c0_176] : memref<1x128xf32, #tpu.memory_space<vmem>>, vector<1x128xf32>
    %392 = vector.broadcast %391 : vector<1x128xf32> to vector<2x128xf32>
    %393 = arith.addf %390, %392 : vector<2x128xf32>
    %cst_177 = arith.constant 0.000000e+00 : f32
    %394 = vector.broadcast %cst_177 : f32 to vector<2x128xf32>
    %395 = arith.maximumf %393, %394 : vector<2x128xf32>
    %c0_178 = arith.constant 0 : index
    %c0_179 = arith.constant 0 : index
    %396 = vector.load %arg21[%c0_178, %c0_179] : memref<128x128xf32, #tpu.memory_space<vmem>>, vector<128x128xf32>
    %cst_180 = arith.constant dense<0.000000e+00> : vector<2x128xf32>
    %397 = tpu.matmul %395, %396, %cst_180 {dimension_numbers = #tpu.dot_dimension_numbers<[1], [0], [0], [1], [0, 0, 1, 1], [], []>} : vector<2x128xf32>, vector<128x128xf32>, vector<2x128xf32> -> vector<2x128xf32>
    %c0_181 = arith.constant 0 : index
    %c0_182 = arith.constant 0 : index
    %398 = vector.load %arg22[%c0_181, %c0_182] : memref<1x128xf32, #tpu.memory_space<vmem>>, vector<1x128xf32>
    %399 = vector.broadcast %398 : vector<1x128xf32> to vector<2x128xf32>
    %400 = arith.addf %397, %399 : vector<2x128xf32>
    %c0_183 = arith.constant 0 : index
    %c0_184 = arith.constant 0 : index
    %401 = vector.load %arg23[%c0_183, %c0_184] : memref<2x128xf32, #tpu.memory_space<vmem>>, vector<2x128xf32>
    tpu.vector_store %arg23[%c0_183, %c0_184], %400 {strides = array<i32>} : memref<2x128xf32, #tpu.memory_space<vmem>>, vector<2x128xf32>,
    return
  }
}

</mosaic_0001>

<llo_original>
// kernel: hybrid_phobert_classifier.1
$region0: #{hybrid_phobert_classifier.1}
  #allocation0 [shape = 'u32[]', space=smem, size = 0x4, offset = 0x4, fixed_abs, tag = 'smem constant byte address 0x4 - core index']
  #allocation1 [shape = 'u32[72,128]{1,0:T(1,128)}', space=vmem, size = 0x9000, scoped, tag = 'internal scratch']
  %s0 = inlined_call_operand.vmem [shape: f32[16,32], index: 0, kind: input, shape index: {}]
  %s1 = inlined_call_operand.vmem [shape: f32[2,8], index: 1, kind: input, shape index: {}]
  %s2 = inlined_call_operand.vmem [shape: f32[2,64], index: 2, kind: input, shape index: {}]
  %s3 = inlined_call_operand.vmem [shape: f32[1,32], index: 3, kind: input, shape index: {}]
  %s4 = inlined_call_operand.vmem [shape: f32[1,32], index: 4, kind: input, shape index: {}]
  %s5 = inlined_call_operand.vmem [shape: f32[2,32,96], index: 5, kind: input, shape index: {}]
  %s6 = inlined_call_operand.vmem [shape: f32[2,1,96], index: 6, kind: input, shape index: {}]
  %s7 = inlined_call_operand.vmem [shape: f32[2,32,32], index: 7, kind: input, shape index: {}]
  %s8 = inlined_call_operand.vmem [shape: f32[2,1,32], index: 8, kind: input, shape index: {}]
  %s9 = inlined_call_operand.vmem [shape: f32[2,1,32], index: 9, kind: input, shape index: {}]
  %s10 = inlined_call_operand.vmem [shape: f32[2,1,32], index: 10, kind: input, shape index: {}]
  %s11 = inlined_call_operand.vmem [shape: f32[2,32,128], index: 11, kind: input, shape index: {}]
  %s12 = inlined_call_operand.vmem [shape: f32[2,1,128], index: 12, kind: input, shape index: {}]
  %s13 = inlined_call_operand.vmem [shape: f32[2,128,32], index: 13, kind: input, shape index: {}]
  %s14 = inlined_call_operand.vmem [shape: f32[2,1,32], index: 14, kind: input, shape index: {}]
  %s15 = inlined_call_operand.vmem [shape: f32[2,1,32], index: 15, kind: input, shape index: {}]
  %s16 = inlined_call_operand.vmem [shape: f32[2,1,32], index: 16, kind: input, shape index: {}]
  %s17 = inlined_call_operand.vmem [shape: f32[64,64], index: 17, kind: input, shape index: {}]
  %s18 = inlined_call_operand.vmem [shape: f32[1,64], index: 18, kind: input, shape index: {}]
  %s19 = inlined_call_operand.vmem [shape: f32[96,128], index: 19, kind: input, shape index: {}]
  %s20 = inlined_call_operand.vmem [shape: f32[1,128], index: 20, kind: input, shape index: {}]
  %s21 = inlined_call_operand.vmem [shape: f32[128,128], index: 21, kind: input, shape index: {}]
  %s22 = inlined_call_operand.vmem [shape: f32[1,128], index: 22, kind: input, shape index: {}]
  %s23 = inlined_call_operand.hbm [shape: f32[2,128], index: 23, kind: output, shape index: {}]
  %s24 = sld [smem:[#allocation0]]
  $region102: #{hybrid_phobert_classifier.1} parent=0
    _
  %s26 = ssub.s32 1, %s24
  %s27 = scalar_select 0, %s26, %s24
  $region1: #{hybrid_phobert_classifier.1} parent=0
    #allocation2 [shape = 'u8[1024]{0}', space=vmem, size = 0x400, scoped, tag = 'output window, operand 0, single buffered']
    #allocation3 [shape = 's32[1]{0}', space=sflag, size = 0x4, scoped, tag = 'scoped memory for hybrid_phobert_classifier.1']
    %28 = vsyncpa [#allocation3], 0
    // Predicated region
    $region2: #{hybrid_phobert_classifier.1} parent=1 // pred_check
      _
    $region3: #{hybrid_phobert_classifier.1} parent=1 // pred_check_branch
      %30 = sbr.rel (0) target = $region5
    $region4: #{hybrid_phobert_classifier.1} parent=1 // pred_region
      _
    $region5: #{hybrid_phobert_classifier.1} parent=1 // pred_fallthru
      _
    // Predicated region
    $region6: #{hybrid_phobert_classifier.1} parent=1 // pred_check
      _
    $region7: #{hybrid_phobert_classifier.1} parent=1 // pred_check_branch
      %32 = sbr.rel (0) target = $region9
    $region8: #{hybrid_phobert_classifier.1} parent=1 // pred_region
      _
    $region9: #{hybrid_phobert_classifier.1} parent=1 // pred_fallthru
      _
    // Predicated region
    $region10: #{hybrid_phobert_classifier.1} parent=1 // pred_check
      _
    $region11: #{hybrid_phobert_classifier.1} parent=1 // pred_check_branch
      %34 = sbr.rel (0) target = $region13
    $region12: #{hybrid_phobert_classifier.1} parent=1 // pred_region
      _
    $region13: #{hybrid_phobert_classifier.1} parent=1 // pred_fallthru
      _
    // Predicated region
    $region14: #{hybrid_phobert_classifier.1} parent=1 // pred_check
      _
    $region15: #{hybrid_phobert_classifier.1} parent=1 // pred_check_branch
      %36 = sbr.rel (0) target = $region17
    $region16: #{hybrid_phobert_classifier.1} parent=1 // pred_region
      _
    $region17: #{hybrid_phobert_classifier.1} parent=1 // pred_fallthru
      _
    // Predicated region
    $region18: #{hybrid_phobert_classifier.1} parent=1 // pred_check
      _
    $region19: #{hybrid_phobert_classifier.1} parent=1 // pred_check_branch
      %38 = sbr.rel (0) target = $region21
    $region20: #{hybrid_phobert_classifier.1} parent=1 // pred_region
      _
    $region21: #{hybrid_phobert_classifier.1} parent=1 // pred_fallthru
      _
    // Predicated region
    $region22: #{hybrid_phobert_classifier.1} parent=1 // pred_check
      _
    $region23: #{hybrid_phobert_classifier.1} parent=1 // pred_check_branch
      %40 = sbr.rel (0) target = $region25
    $region24: #{hybrid_phobert_classifier.1} parent=1 // pred_region
      _
    $region25: #{hybrid_phobert_classifier.1} parent=1 // pred_fallthru
      _
    // Predicated region
    $region26: #{hybrid_phobert_classifier.1} parent=1 // pred_check
      _
    $region27: #{hybrid_phobert_classifier.1} parent=1 // pred_check_branch
      %42 = sbr.rel (0) target = $region29
    $region28: #{hybrid_phobert_classifier.1} parent=1 // pred_region
      _
    $region29: #{hybrid_phobert_classifier.1} parent=1 // pred_fallthru
      _
    // Predicated region
    $region30: #{hybrid_phobert_classifier.1} parent=1 // pred_check
      _
    $region31: #{hybrid_phobert_classifier.1} parent=1 // pred_check_branch
      %44 = sbr.rel (0) target = $region33
    $region32: #{hybrid_phobert_classifier.1} parent=1 // pred_region
      _
    $region33: #{hybrid_phobert_classifier.1} parent=1 // pred_fallthru
      _
    // Predicated region
    $region34: #{hybrid_phobert_classifier.1} parent=1 // pred_check
      _
    $region35: #{hybrid_phobert_classifier.1} parent=1 // pred_check_branch
      %46 = sbr.rel (0) target = $region37
    $region36: #{hybrid_phobert_classifier.1} parent=1 // pred_region
      _
    $region37: #{hybrid_phobert_classifier.1} parent=1 // pred_fallthru
      _
    // Predicated region
    $region38: #{hybrid_phobert_classifier.1} parent=1 // pred_check
      _
    $region39: #{hybrid_phobert_classifier.1} parent=1 // pred_check_branch
      %48 = sbr.rel (0) target = $region41
    $region40: #{hybrid_phobert_classifier.1} parent=1 // pred_region
      _
    $region41: #{hybrid_phobert_classifier.1} parent=1 // pred_fallthru
      _
    // Predicated region
    $region42: #{hybrid_phobert_classifier.1} parent=1 // pred_check
      _
    $region43: #{hybrid_phobert_classifier.1} parent=1 // pred_check_branch
      %50 = sbr.rel (0) target = $region45
    $region44: #{hybrid_phobert_classifier.1} parent=1 // pred_region
      _
    $region45: #{hybrid_phobert_classifier.1} parent=1 // pred_fallthru
      _
    // Predicated region
    $region46: #{hybrid_phobert_classifier.1} parent=1 // pred_check
      _
    $region47: #{hybrid_phobert_classifier.1} parent=1 // pred_check_branch
      %52 = sbr.rel (0) target = $region49
    $region48: #{hybrid_phobert_classifier.1} parent=1 // pred_region
      _
    $region49: #{hybrid_phobert_classifier.1} parent=1 // pred_fallthru
      _
    // Predicated region
    $region50: #{hybrid_phobert_classifier.1} parent=1 // pred_check
      _
    $region51: #{hybrid_phobert_classifier.1} parent=1 // pred_check_branch
      %54 = sbr.rel (0) target = $region53
    $region52: #{hybrid_phobert_classifier.1} parent=1 // pred_region
      _
    $region53: #{hybrid_phobert_classifier.1} parent=1 // pred_fallthru
      _
    // Predicated region
    $region54: #{hybrid_phobert_classifier.1} parent=1 // pred_check
      _
    $region55: #{hybrid_phobert_classifier.1} parent=1 // pred_check_branch
      %56 = sbr.rel (0) target = $region57
    $region56: #{hybrid_phobert_classifier.1} parent=1 // pred_region
      _
    $region57: #{hybrid_phobert_classifier.1} parent=1 // pred_fallthru
      _
    // Predicated region
    $region58: #{hybrid_phobert_classifier.1} parent=1 // pred_check
      _
    $region59: #{hybrid_phobert_classifier.1} parent=1 // pred_check_branch
      %58 = sbr.rel (0) target = $region61
    $region60: #{hybrid_phobert_classifier.1} parent=1 // pred_region
      _
    $region61: #{hybrid_phobert_classifier.1} parent=1 // pred_fallthru
      _
    // Predicated region
    $region62: #{hybrid_phobert_classifier.1} parent=1 // pred_check
      _
    $region63: #{hybrid_phobert_classifier.1} parent=1 // pred_check_branch
      %60 = sbr.rel (0) target = $region65
    $region64: #{hybrid_phobert_classifier.1} parent=1 // pred_region
      _
    $region65: #{hybrid_phobert_classifier.1} parent=1 // pred_fallthru
      _
    // Predicated region
    $region66: #{hybrid_phobert_classifier.1} parent=1 // pred_check
      _
    $region67: #{hybrid_phobert_classifier.1} parent=1 // pred_check_branch
      %62 = sbr.rel (0) target = $region69
    $region68: #{hybrid_phobert_classifier.1} parent=1 // pred_region
      _
    $region69: #{hybrid_phobert_classifier.1} parent=1 // pred_fallthru
      _
    // Predicated region
    $region70: #{hybrid_phobert_classifier.1} parent=1 // pred_check
      _
    $region71: #{hybrid_phobert_classifier.1} parent=1 // pred_check_branch
      %64 = sbr.rel (0) target = $region73
    $region72: #{hybrid_phobert_classifier.1} parent=1 // pred_region
      _
    $region73: #{hybrid_phobert_classifier.1} parent=1 // pred_fallthru
      _
    // Predicated region
    $region74: #{hybrid_phobert_classifier.1} parent=1 // pred_check
      _
    $region75: #{hybrid_phobert_classifier.1} parent=1 // pred_check_branch
      %66 = sbr.rel (0) target = $region77
    $region76: #{hybrid_phobert_classifier.1} parent=1 // pred_region
      _
    $region77: #{hybrid_phobert_classifier.1} parent=1 // pred_fallthru
      _
    // Predicated region
    $region78: #{hybrid_phobert_classifier.1} parent=1 // pred_check
      _
    $region79: #{hybrid_phobert_classifier.1} parent=1 // pred_check_branch
      %68 = sbr.rel (0) target = $region81
    $region80: #{hybrid_phobert_classifier.1} parent=1 // pred_region
      _
    $region81: #{hybrid_phobert_classifier.1} parent=1 // pred_fallthru
      _
    // Predicated region
    $region82: #{hybrid_phobert_classifier.1} parent=1 // pred_check
      _
    $region83: #{hybrid_phobert_classifier.1} parent=1 // pred_check_branch
      %70 = sbr.rel (0) target = $region85
    $region84: #{hybrid_phobert_classifier.1} parent=1 // pred_region
      _
    $region85: #{hybrid_phobert_classifier.1} parent=1 // pred_fallthru
      _
    // Predicated region
    $region86: #{hybrid_phobert_classifier.1} parent=1 // pred_check
      _
    $region87: #{hybrid_phobert_classifier.1} parent=1 // pred_check_branch
      %72 = sbr.rel (0) target = $region89
    $region88: #{hybrid_phobert_classifier.1} parent=1 // pred_region
      _
    $region89: #{hybrid_phobert_classifier.1} parent=1 // pred_fallthru
      _
    // Predicated region
    $region90: #{hybrid_phobert_classifier.1} parent=1 // pred_check
      _
    $region91: #{hybrid_phobert_classifier.1} parent=1 // pred_check_branch
      %74 = sbr.rel (0) target = $region93
    $region92: #{hybrid_phobert_classifier.1} parent=1 // pred_region
      _
    $region93: #{hybrid_phobert_classifier.1} parent=1 // pred_fallthru
      _
    %v75 = vld [vmem:[%s0] sm:$0xff]
    %v76 = vld [vmem:[%s0 + $0x8] sm:$0xff]
    %v77 = vld [vmem:[%s3] sm:$0x1]
    %v78 = vld [vmem:[%s4] sm:$0x1]
    %vm79 = vcmask 261120
    %v80 = vsel %vm79, %v75, 0.0
    %81 = vadd.xlane.f32.xlu0 %v80
    %v82 = vpop.xlane.xlu0 %81
    %v83 = vsel %vm79, %v76, 0.0
    %84 = vadd.xlane.f32.xlu0 %v83
    %v85 = vpop.xlane.xlu0 %84
    %v86 = vrcp.pop 32.0
    %v87 = vmul.f32 32.0, %v86
    %v88 = vsub.f32 1.0, %v87
    %v89 = vmul.f32 %v86, %v88
    %v90 = vadd.f32 %v86, %v89
    %vm91 = vweird.f32 %v86
    %v92 = vsel %vm91, %v86, %v90
    %v93 = vmul.f32 %v82, %v92
    %v94 = vmul.f32 %v85, %v92
    %v95 = vsub.f32 %v75, %v93
    %v96 = vsub.f32 %v76, %v94
    %v97 = vmul.f32 %v95, %v95
    %v98 = vmul.f32 %v96, %v96
    %v99 = vsel %vm79, %v97, 0.0
    %100 = vadd.xlane.f32.xlu0 %v99
    %v101 = vpop.xlane.xlu0 %100
    %v102 = vsel %vm79, %v98, 0.0
    %103 = vadd.xlane.f32.xlu0 %v102
    %v104 = vpop.xlane.xlu0 %103
    %v105 = vmul.f32 %v101, %v92
    %v106 = vmul.f32 %v104, %v92
    %v107 = vadd.f32 %v105, 1e-05
    %v108 = vadd.f32 %v106, 1e-05
    %v109 = vrsqrt.pop %v107
    %v110 = vmul.f32 %v109, %v107
    %v111 = vmul.f32 %v110, %v109
    %v112 = vmul.f32 0.5, %v111
    %v113 = vsub.f32 1.5, %v112
    %v114 = vmul.f32 %v109, %v113
    %vm115 = vweird.f32 %v107
    %vm116 = vweird.f32 %v109
    %vm117 = vmor %vm115, %vm116
    %v118 = vsel %vm117, %v109, %v114
    %v119 = vrsqrt.pop %v108
    %v120 = vmul.f32 %v119, %v108
    %v121 = vmul.f32 %v120, %v119
    %v122 = vmul.f32 0.5, %v121
    %v123 = vsub.f32 1.5, %v122
    %v124 = vmul.f32 %v119, %v123
    %vm125 = vweird.f32 %v108
    %vm126 = vweird.f32 %v119
    %vm127 = vmor %vm125, %vm126
    %v128 = vsel %vm127, %v119, %v124
    %v129 = vmul.f32 %v95, %v118
    %v130 = vmul.f32 %v96, %v128
    %v132 = vperm.slane %v77, 0
    %v134 = vmul.f32 %v129, %v132
    %v135 = vmul.f32 %v130, %v132
    %v137 = vperm.slane %v78, 0
    %v139 = vadd.f32 %v134, %v137
    %v140 = vadd.f32 %v135, %v137
    %v141 = vld [vmem:[%s5] sm:$0xff]
    %v142 = vld [vmem:[%s5 + $0x8] sm:$0xff]
    %v143 = vld [vmem:[%s5 + $0x10] sm:$0xff]
    %v144 = vld [vmem:[%s5 + $0x18] sm:$0xff]
    %v145 = vld [vmem:[%s6] sm:$0x1]
    %v147 = vperm.slane %v145, 0
    %v150 = vsel %vm79, %v139, 0
    %v153 = vsel %vm79, %v140, 0
    %155 = vmatpush.msra.mxu0 0.0
    %156 = vmatpush.msra.mxu0 0.0
    %157 = vmatpush.msra.mxu0 0.0
    %158 = vmatpush.msra.mxu0 0.0
    %159 = vmatpush.msra.mxu0 0.0
    %160 = vmatpush.msra.mxu0 0.0
    %161 = vmatpush.msra.mxu0 0.0
    %162 = vmatpush.msra.mxu0 0.0
    %163 = vmatpush.msra.mxu0 0.0
    %164 = vmatpush.msra.mxu0 0.0
    %165 = vmatpush.msra.mxu0 0.0
    %166 = vmatpush.msra.mxu0 0.0
    %167 = vmatpush.msra.mxu0 %v144
    %168 = vmatpush.msra.mxu0 %v143
    %169 = vmatpush.msra.mxu0 %v142
    %170 = vmatpush.msra.mxu0 %v141
    %171 = vmatmul.f32.gmra.mxu0 %v150
    %v172 = vpop.f32.mrf.mxu0
    %v173 = vadd.f32 %v147, %v172
    %174 = vmatmul.f32.gmra.mxu0 %v153
    %v175 = vpop.f32.mrf.mxu0
    %v176 = vadd.f32 %v147, %v175
    %177 = vdwg.mxu0
    %v178 = vld [vmem:[%s1] sm:$0x1]
    %180 = vrot.lane.b32.xlu0 %v173, 96
    %v181 = vpop.permute.xlu0 %180
    %vm182 = vcmask 130048
    %v183 = vsel %vm182, %v173, 0
    %v185 = vsel %vm182, %v181, 0
    %187 = vmatpush.xpose.msra.mxu0 0.0
    %188 = vmatpush.xpose.msra.mxu0 0.0
    %189 = vmatpush.xpose.msra.mxu0 0.0
    %190 = vmatpush.xpose.msra.mxu0 0.0
    %191 = vmatpush.xpose.msra.mxu0 0.0
    %192 = vmatpush.xpose.msra.mxu0 0.0
    %193 = vmatpush.xpose.msra.mxu0 0.0
    %194 = vmatpush.xpose.msra.mxu0 0.0
    %195 = vmatpush.xpose.msra.mxu0 0.0
    %196 = vmatpush.xpose.msra.mxu0 0.0
    %197 = vmatpush.xpose.msra.mxu0 0.0
    %198 = vmatpush.xpose.msra.mxu0 0.0
    %199 = vmatpush.xpose.msra.mxu0 0.0
    %200 = vmatpush.xpose.msra.mxu0 0.0
    %201 = vmatpush.xpose.msra.mxu0 0.0
    %202 = vmatpush.xpose.msra.mxu0 %v185
    %203 = vmatmul.f32.gmra.mxu0 %v183
    %v204 = vpop.f32.mrf.mxu0
    %v205 = vadd.f32 0.0, %v204
    %206 = vdwg.mxu0
    %v207 = vmul.f32 %v205, 0.25
    %v208 = vperm.slane %v178, 0
    %v209 = vadd.f32 %v207, %v208
    %vm210 = vcmask 64512
    %v211 = vsel %vm210, %v209, -inf
    %212 = vmax.xlane.f32.xlu0 %v211
    %v213 = vpop.xlane.xlu0 %212
    %v214 = vsub.f32 %v209, %v213
    %v215 = vmul.f32 %v214, 1.442695
    %v216 = vpow.pop %v215
    %v217 = vsel %vm210, %v216, 0.0
    %218 = vadd.xlane.f32.xlu0 %v217
    %v219 = vpop.xlane.xlu0 %218
    %v220 = vrcp.pop %v219
    %v221 = vmul.f32 %v216, %v220
    %222 = vrot.lane.b32.xlu0 %v173, 64
    %v223 = vpop.permute.xlu0 %222
    %v226 = vsel %vm210, %v221, 0
    %228 = vmatpush.msra.mxu0 0.0
    %229 = vmatpush.msra.mxu0 0.0
    %230 = vmatpush.msra.mxu0 0.0
    %231 = vmatpush.msra.mxu0 0.0
    %232 = vmatpush.msra.mxu0 0.0
    %233 = vmatpush.msra.mxu0 0.0
    %234 = vmatpush.msra.mxu0 0.0
    %235 = vmatpush.msra.mxu0 0.0
    %236 = vmatpush.msra.mxu0 0.0
    %237 = vmatpush.msra.mxu0 0.0
    %238 = vmatpush.msra.mxu0 0.0
    %239 = vmatpush.msra.mxu0 0.0
    %240 = vmatpush.msra.mxu0 0.0
    %241 = vmatpush.msra.mxu0 0.0
    %242 = vmatpush.msra.mxu0 0.0
    %243 = vmatpush.msra.mxu0 %v223
    %244 = vmatmul.f32.gmra.mxu0 %v226
    %v245 = vpop.f32.mrf.mxu0
    %v246 = vadd.f32 0.0, %v245
    %247 = vdwg.mxu0
    %248 = vrot.lane.b32.xlu0 %v173, 112
    %v249 = vpop.permute.xlu0 %248
    %250 = vrot.lane.b32.xlu0 %v173, 80
    %v251 = vpop.permute.xlu0 %250
    %v252 = vsel %vm182, %v249, 0
    %v254 = vsel %vm182, %v251, 0
    %256 = vmatpush.xpose.msra.mxu0 0.0
    %257 = vmatpush.xpose.msra.mxu0 0.0
    %258 = vmatpush.xpose.msra.mxu0 0.0
    %259 = vmatpush.xpose.msra.mxu0 0.0
    %260 = vmatpush.xpose.msra.mxu0 0.0
    %261 = vmatpush.xpose.msra.mxu0 0.0
    %262 = vmatpush.xpose.msra.mxu0 0.0
    %263 = vmatpush.xpose.msra.mxu0 0.0
    %264 = vmatpush.xpose.msra.mxu0 0.0
    %265 = vmatpush.xpose.msra.mxu0 0.0
    %266 = vmatpush.xpose.msra.mxu0 0.0
    %267 = vmatpush.xpose.msra.mxu0 0.0
    %268 = vmatpush.xpose.msra.mxu0 0.0
    %269 = vmatpush.xpose.msra.mxu0 0.0
    %270 = vmatpush.xpose.msra.mxu0 0.0
    %271 = vmatpush.xpose.msra.mxu0 %v254
    %272 = vmatmul.f32.gmra.mxu0 %v252
    %v273 = vpop.f32.mrf.mxu0
    %v274 = vadd.f32 0.0, %v273
    %275 = vdwg.mxu0
    %v276 = vmul.f32 %v274, 0.25
    %v277 = vadd.f32 %v276, %v208
    %v278 = vsel %vm210, %v277, -inf
    %279 = vmax.xlane.f32.xlu0 %v278
    %v280 = vpop.xlane.xlu0 %279
    %v281 = vsub.f32 %v277, %v280
    %v282 = vmul.f32 %v281, 1.442695
    %v283 = vpow.pop %v282
    %v284 = vsel %vm210, %v283, 0.0
    %285 = vadd.xlane.f32.xlu0 %v284
    %v286 = vpop.xlane.xlu0 %285
    %v287 = vrcp.pop %v286
    %v288 = vmul.f32 %v283, %v287
    %289 = vrot.lane.b32.xlu0 %v173, 48
    %v290 = vpop.permute.xlu0 %289
    %v293 = vsel %vm210, %v288, 0
    %295 = vmatpush.msra.mxu0 0.0
    %296 = vmatpush.msra.mxu0 0.0
    %297 = vmatpush.msra.mxu0 0.0
    %298 = vmatpush.msra.mxu0 0.0
    %299 = vmatpush.msra.mxu0 0.0
    %300 = vmatpush.msra.mxu0 0.0
    %301 = vmatpush.msra.mxu0 0.0
    %302 = vmatpush.msra.mxu0 0.0
    %303 = vmatpush.msra.mxu0 0.0
    %304 = vmatpush.msra.mxu0 0.0
    %305 = vmatpush.msra.mxu0 0.0
    %306 = vmatpush.msra.mxu0 0.0
    %307 = vmatpush.msra.mxu0 0.0
    %308 = vmatpush.msra.mxu0 0.0
    %309 = vmatpush.msra.mxu0 0.0
    %310 = vmatpush.msra.mxu0 %v290
    %311 = vmatmul.f32.gmra.mxu0 %v293
    %v312 = vpop.f32.mrf.mxu0
    %v313 = vadd.f32 0.0, %v312
    %314 = vdwg.mxu0
    %316 = vrot.lane.b32.xlu0 %v313, 16
    %v317 = vpop.permute.xlu0 %316
    %v319 = vsel %vm182, %v246, %v317
    %v320 = vld [vmem:[%s1 + $0x1] sm:$0x1]
    %322 = vrot.lane.b32.xlu0 %v176, 96
    %v323 = vpop.permute.xlu0 %322
    %v324 = vsel %vm182, %v176, 0
    %v326 = vsel %vm182, %v323, 0
    %328 = vmatpush.xpose.msra.mxu0 0.0
    %329 = vmatpush.xpose.msra.mxu0 0.0
    %330 = vmatpush.xpose.msra.mxu0 0.0
    %331 = vmatpush.xpose.msra.mxu0 0.0
    %332 = vmatpush.xpose.msra.mxu0 0.0
    %333 = vmatpush.xpose.msra.mxu0 0.0
    %334 = vmatpush.xpose.msra.mxu0 0.0
    %335 = vmatpush.xpose.msra.mxu0 0.0
    %336 = vmatpush.xpose.msra.mxu0 0.0
    %337 = vmatpush.xpose.msra.mxu0 0.0
    %338 = vmatpush.xpose.msra.mxu0 0.0
    %339 = vmatpush.xpose.msra.mxu0 0.0
    %340 = vmatpush.xpose.msra.mxu0 0.0
    %341 = vmatpush.xpose.msra.mxu0 0.0
    %342 = vmatpush.xpose.msra.mxu0 0.0
    %343 = vmatpush.xpose.msra.mxu0 %v326
    %344 = vmatmul.f32.gmra.mxu0 %v324
    %v345 = vpop.f32.mrf.mxu0
    %v346 = vadd.f32 0.0, %v345
    %347 = vdwg.mxu0
    %v348 = vmul.f32 %v346, 0.25
    %v349 = vperm.slane %v320, 0
    %v350 = vadd.f32 %v348, %v349
    %v351 = vsel %vm210, %v350, -inf
    %352 = vmax.xlane.f32.xlu0 %v351
    %v353 = vpop.xlane.xlu0 %352
    %v354 = vsub.f32 %v350, %v353
    %v355 = vmul.f32 %v354, 1.442695
    %v356 = vpow.pop %v355
    %v357 = vsel %vm210, %v356, 0.0
    %358 = vadd.xlane.f32.xlu0 %v357
    %v359 = vpop.xlane.xlu0 %358
    %v360 = vrcp.pop %v359
    %v361 = vmul.f32 %v356, %v360
    %362 = vrot.lane.b32.xlu0 %v176, 64
    %v363 = vpop.permute.xlu0 %362
    %v366 = vsel %vm210, %v361, 0
    %368 = vmatpush.msra.mxu0 0.0
    %369 = vmatpush.msra.mxu0 0.0
    %370 = vmatpush.msra.mxu0 0.0
    %371 = vmatpush.msra.mxu0 0.0
    %372 = vmatpush.msra.mxu0 0.0
    %373 = vmatpush.msra.mxu0 0.0
    %374 = vmatpush.msra.mxu0 0.0
    %375 = vmatpush.msra.mxu0 0.0
    %376 = vmatpush.msra.mxu0 0.0
    %377 = vmatpush.msra.mxu0 0.0
    %378 = vmatpush.msra.mxu0 0.0
    %379 = vmatpush.msra.mxu0 0.0
    %380 = vmatpush.msra.mxu0 0.0
    %381 = vmatpush.msra.mxu0 0.0
    %382 = vmatpush.msra.mxu0 0.0
    %383 = vmatpush.msra.mxu0 %v363
    %384 = vmatmul.f32.gmra.mxu0 %v366
    %v385 = vpop.f32.mrf.mxu0
    %v386 = vadd.f32 0.0, %v385
    %387 = vdwg.mxu0
    %388 = vrot.lane.b32.xlu0 %v176, 112
    %v389 = vpop.permute.xlu0 %388
    %390 = vrot.lane.b32.xlu0 %v176, 80
    %v391 = vpop.permute.xlu0 %390
    %v392 = vsel %vm182, %v389, 0
    %v394 = vsel %vm182, %v391, 0
    %396 = vmatpush.xpose.msra.mxu0 0.0
    %397 = vmatpush.xpose.msra.mxu0 0.0
    %398 = vmatpush.xpose.msra.mxu0 0.0
    %399 = vmatpush.xpose.msra.mxu0 0.0
    %400 = vmatpush.xpose.msra.mxu0 0.0
    %401 = vmatpush.xpose.msra.mxu0 0.0
    %402 = vmatpush.xpose.msra.mxu0 0.0
    %403 = vmatpush.xpose.msra.mxu0 0.0
    %404 = vmatpush.xpose.msra.mxu0 0.0
    %405 = vmatpush.xpose.msra.mxu0 0.0
    %406 = vmatpush.xpose.msra.mxu0 0.0
    %407 = vmatpush.xpose.msra.mxu0 0.0
    %408 = vmatpush.xpose.msra.mxu0 0.0
    %409 = vmatpush.xpose.msra.mxu0 0.0
    %410 = vmatpush.xpose.msra.mxu0 0.0
    %411 = vmatpush.xpose.msra.mxu0 %v394
    %412 = vmatmul.f32.gmra.mxu0 %v392
    %v413 = vpop.f32.mrf.mxu0
    %v414 = vadd.f32 0.0, %v413
    %415 = vdwg.mxu0
    %v416 = vmul.f32 %v414, 0.25
    %v417 = vadd.f32 %v416, %v349
    %v418 = vsel %vm210, %v417, -inf
    %419 = vmax.xlane.f32.xlu0 %v418
    %v420 = vpop.xlane.xlu0 %419
    %v421 = vsub.f32 %v417, %v420
    %v422 = vmul.f32 %v421, 1.442695
    %v423 = vpow.pop %v422
    %v424 = vsel %vm210, %v423, 0.0
    %425 = vadd.xlane.f32.xlu0 %v424
    %v426 = vpop.xlane.xlu0 %425
    %v427 = vrcp.pop %v426
    %v428 = vmul.f32 %v423, %v427
    %429 = vrot.lane.b32.xlu0 %v176, 48
    %v430 = vpop.permute.xlu0 %429
    %v433 = vsel %vm210, %v428, 0
    %435 = vmatpush.msra.mxu0 0.0
    %436 = vmatpush.msra.mxu0 0.0
    %437 = vmatpush.msra.mxu0 0.0
    %438 = vmatpush.msra.mxu0 0.0
    %439 = vmatpush.msra.mxu0 0.0
    %440 = vmatpush.msra.mxu0 0.0
    %441 = vmatpush.msra.mxu0 0.0
    %442 = vmatpush.msra.mxu0 0.0
    %443 = vmatpush.msra.mxu0 0.0
    %444 = vmatpush.msra.mxu0 0.0
    %445 = vmatpush.msra.mxu0 0.0
    %446 = vmatpush.msra.mxu0 0.0
    %447 = vmatpush.msra.mxu0 0.0
    %448 = vmatpush.msra.mxu0 0.0
    %449 = vmatpush.msra.mxu0 0.0
    %450 = vmatpush.msra.mxu0 %v430
    %451 = vmatmul.f32.gmra.mxu0 %v433
    %v452 = vpop.f32.mrf.mxu0
    %v453 = vadd.f32 0.0, %v452
    %454 = vdwg.mxu0
    %456 = vrot.lane.b32.xlu0 %v453, 16
    %v457 = vpop.permute.xlu0 %456
    %v459 = vsel %vm182, %v386, %v457
    %v460 = vld [vmem:[%s7] sm:$0xff]
    %v461 = vld [vmem:[%s7 + $0x8] sm:$0xff]
    %v462 = vld [vmem:[%s7 + $0x10] sm:$0xff]
    %v463 = vld [vmem:[%s7 + $0x18] sm:$0xff]
    %v464 = vld [vmem:[%s8] sm:$0x1]
    %v466 = vperm.slane %v464, 0
    %v469 = vsel %vm79, %v319, 0
    %v472 = vsel %vm79, %v459, 0
    %474 = vmatpush.msra.mxu0 0.0
    %475 = vmatpush.msra.mxu0 0.0
    %476 = vmatpush.msra.mxu0 0.0
    %477 = vmatpush.msra.mxu0 0.0
    %478 = vmatpush.msra.mxu0 0.0
    %479 = vmatpush.msra.mxu0 0.0
    %480 = vmatpush.msra.mxu0 0.0
    %481 = vmatpush.msra.mxu0 0.0
    %482 = vmatpush.msra.mxu0 0.0
    %483 = vmatpush.msra.mxu0 0.0
    %484 = vmatpush.msra.mxu0 0.0
    %485 = vmatpush.msra.mxu0 0.0
    %486 = vmatpush.msra.mxu0 %v463
    %487 = vmatpush.msra.mxu0 %v462
    %488 = vmatpush.msra.mxu0 %v461
    %489 = vmatpush.msra.mxu0 %v460
    %490 = vmatmul.f32.gmra.mxu0 %v469
    %v491 = vpop.f32.mrf.mxu0
    %v492 = vadd.f32 %v466, %v491
    %493 = vmatmul.f32.gmra.mxu0 %v472
    %v494 = vpop.f32.mrf.mxu0
    %v495 = vadd.f32 %v466, %v494
    %496 = vdwg.mxu0
    %v497 = vadd.f32 %v139, %v492
    %v498 = vadd.f32 %v140, %v495
    %v499 = vld [vmem:[%s9] sm:$0x1]
    %v500 = vld [vmem:[%s10] sm:$0x1]
    %v501 = vsel %vm79, %v497, 0.0
    %502 = vadd.xlane.f32.xlu0 %v501
    %v503 = vpop.xlane.xlu0 %502
    %v504 = vsel %vm79, %v498, 0.0
    %505 = vadd.xlane.f32.xlu0 %v504
    %v506 = vpop.xlane.xlu0 %505
    %v507 = vmul.f32 %v503, %v92
    %v508 = vmul.f32 %v506, %v92
    %v509 = vsub.f32 %v497, %v507
    %v510 = vsub.f32 %v498, %v508
    %v511 = vmul.f32 %v509, %v509
    %v512 = vmul.f32 %v510, %v510
    %v513 = vsel %vm79, %v511, 0.0
    %514 = vadd.xlane.f32.xlu0 %v513
    %v515 = vpop.xlane.xlu0 %514
    %v516 = vsel %vm79, %v512, 0.0
    %517 = vadd.xlane.f32.xlu0 %v516
    %v518 = vpop.xlane.xlu0 %517
    %v519 = vmul.f32 %v515, %v92
    %v520 = vmul.f32 %v518, %v92
    %v521 = vadd.f32 %v519, 1e-05
    %v522 = vadd.f32 %v520, 1e-05
    %v523 = vrsqrt.pop %v521
    %v524 = vmul.f32 %v523, %v521
    %v525 = vmul.f32 %v524, %v523
    %v526 = vmul.f32 0.5, %v525
    %v527 = vsub.f32 1.5, %v526
    %v528 = vmul.f32 %v523, %v527
    %vm529 = vweird.f32 %v521
    %vm530 = vweird.f32 %v523
    %vm531 = vmor %vm529, %vm530
    %v532 = vsel %vm531, %v523, %v528
    %v533 = vrsqrt.pop %v522
    %v534 = vmul.f32 %v533, %v522
    %v535 = vmul.f32 %v534, %v533
    %v536 = vmul.f32 0.5, %v535
    %v537 = vsub.f32 1.5, %v536
    %v538 = vmul.f32 %v533, %v537
    %vm539 = vweird.f32 %v522
    %vm540 = vweird.f32 %v533
    %vm541 = vmor %vm539, %vm540
    %v542 = vsel %vm541, %v533, %v538
    %v543 = vmul.f32 %v509, %v532
    %v544 = vmul.f32 %v510, %v542
    %v546 = vperm.slane %v499, 0
    %v548 = vmul.f32 %v543, %v546
    %v549 = vmul.f32 %v544, %v546
    %v551 = vperm.slane %v500, 0
    %v553 = vadd.f32 %v548, %v551
    %v554 = vadd.f32 %v549, %v551
    %v555 = vld [vmem:[%s11] sm:$0xff]
    %v556 = vld [vmem:[%s11 + $0x8] sm:$0xff]
    %v557 = vld [vmem:[%s11 + $0x10] sm:$0xff]
    %v558 = vld [vmem:[%s11 + $0x18] sm:$0xff]
    %v559 = vld [vmem:[%s12] sm:$0x1]
    %v561 = vperm.slane %v559, 0
    %v564 = vsel %vm79, %v553, 0
    %v567 = vsel %vm79, %v554, 0
    %569 = vmatpush.msra.mxu0 0.0
    %570 = vmatpush.msra.mxu0 0.0
    %571 = vmatpush.msra.mxu0 0.0
    %572 = vmatpush.msra.mxu0 0.0
    %573 = vmatpush.msra.mxu0 0.0
    %574 = vmatpush.msra.mxu0 0.0
    %575 = vmatpush.msra.mxu0 0.0
    %576 = vmatpush.msra.mxu0 0.0
    %577 = vmatpush.msra.mxu0 0.0
    %578 = vmatpush.msra.mxu0 0.0
    %579 = vmatpush.msra.mxu0 0.0
    %580 = vmatpush.msra.mxu0 0.0
    %581 = vmatpush.msra.mxu0 %v558
    %582 = vmatpush.msra.mxu0 %v557
    %583 = vmatpush.msra.mxu0 %v556
    %584 = vmatpush.msra.mxu0 %v555
    %585 = vmatmul.f32.gmra.mxu0 %v564
    %v586 = vpop.f32.mrf.mxu0
    %v587 = vadd.f32 %v561, %v586
    %588 = vmatmul.f32.gmra.mxu0 %v567
    %v589 = vpop.f32.mrf.mxu0
    %v590 = vadd.f32 %v561, %v589
    %591 = vdwg.mxu0
    %v592 = vmul.f32 %v587, %v587
    %v593 = vmul.f32 %v590, %v590
    %v594 = vmul.f32 %v587, %v592
    %v595 = vmul.f32 %v590, %v593
    %v596 = vmul.f32 %v594, 0.044715
    %v597 = vmul.f32 %v595, 0.044715
    %v598 = vadd.f32 %v587, %v596
    %v599 = vadd.f32 %v590, %v597
    %v600 = vmul.f32 %v598, 0.7978846
    %v601 = vmul.f32 %v599, 0.7978846
    %v602 = vtanh.pop %v600
    %v603 = vtanh.pop %v601
    %v604 = vadd.f32 %v602, 1.0
    %v605 = vadd.f32 %v603, 1.0
    %v606 = vmul.f32 %v604, 0.5
    %v607 = vmul.f32 %v605, 0.5
    %v608 = vmul.f32 %v587, %v606
    %v609 = vmul.f32 %v590, %v607
    %v610 = vld [vmem:[%s13] sm:$0xff]
    %v611 = vld [vmem:[%s13 + $0x8] sm:$0xff]
    %v612 = vld [vmem:[%s13 + $0x10] sm:$0xff]
    %v613 = vld [vmem:[%s13 + $0x18] sm:$0xff]
    %v614 = vld [vmem:[%s13 + $0x20] sm:$0xff]
    %v615 = vld [vmem:[%s13 + $0x28] sm:$0xff]
    %v616 = vld [vmem:[%s13 + $0x30] sm:$0xff]
    %v617 = vld [vmem:[%s13 + $0x38] sm:$0xff]
    %v618 = vld [vmem:[%s13 + $0x40] sm:$0xff]
    %v619 = vld [vmem:[%s13 + $0x48] sm:$0xff]
    %v620 = vld [vmem:[%s13 + $0x50] sm:$0xff]
    %v621 = vld [vmem:[%s13 + $0x58] sm:$0xff]
    %v622 = vld [vmem:[%s13 + $0x60] sm:$0xff]
    %v623 = vld [vmem:[%s13 + $0x68] sm:$0xff]
    %v624 = vld [vmem:[%s13 + $0x70] sm:$0xff]
    %v625 = vld [vmem:[%s13 + $0x78] sm:$0xff]
    %v626 = vld [vmem:[%s14] sm:$0x1]
    %v628 = vperm.slane %v626, 0
    %630 = vmatpush.msra.mxu0 %v625
    %631 = vmatpush.msra.mxu0 %v624
    %632 = vmatpush.msra.mxu0 %v623
    %633 = vmatpush.msra.mxu0 %v622
    %634 = vmatpush.msra.mxu0 %v621
    %635 = vmatpush.msra.mxu0 %v620
    %636 = vmatpush.msra.mxu0 %v619
    %637 = vmatpush.msra.mxu0 %v618
    %638 = vmatpush.msra.mxu0 %v617
    %639 = vmatpush.msra.mxu0 %v616
    %640 = vmatpush.msra.mxu0 %v615
    %641 = vmatpush.msra.mxu0 %v614
    %642 = vmatpush.msra.mxu0 %v613
    %643 = vmatpush.msra.mxu0 %v612
    %644 = vmatpush.msra.mxu0 %v611
    %645 = vmatpush.msra.mxu0 %v610
    %646 = vmatmul.f32.gmra.mxu0 %v608
    %v647 = vpop.f32.mrf.mxu0
    %v648 = vadd.f32 %v628, %v647
    %649 = vmatmul.f32.gmra.mxu0 %v609
    %v650 = vpop.f32.mrf.mxu0
    %v651 = vadd.f32 %v628, %v650
    %652 = vdwg.mxu0
    %v653 = vadd.f32 %v553, %v648
    %v654 = vadd.f32 %v554, %v651
    %v655 = vld [vmem:[%s15] sm:$0x1]
    %v656 = vld [vmem:[%s16] sm:$0x1]
    %v657 = vsel %vm79, %v653, 0.0
    %658 = vadd.xlane.f32.xlu0 %v657
    %v659 = vpop.xlane.xlu0 %658
    %v660 = vsel %vm79, %v654, 0.0
    %661 = vadd.xlane.f32.xlu0 %v660
    %v662 = vpop.xlane.xlu0 %661
    %v663 = vmul.f32 %v659, %v92
    %v664 = vmul.f32 %v662, %v92
    %v665 = vsub.f32 %v653, %v663
    %v666 = vsub.f32 %v654, %v664
    %v667 = vmul.f32 %v665, %v665
    %v668 = vmul.f32 %v666, %v666
    %v669 = vsel %vm79, %v667, 0.0
    %670 = vadd.xlane.f32.xlu0 %v669
    %v671 = vpop.xlane.xlu0 %670
    %v672 = vsel %vm79, %v668, 0.0
    %673 = vadd.xlane.f32.xlu0 %v672
    %v674 = vpop.xlane.xlu0 %673
    %v675 = vmul.f32 %v671, %v92
    %v676 = vmul.f32 %v674, %v92
    %v677 = vadd.f32 %v675, 1e-05
    %v678 = vadd.f32 %v676, 1e-05
    %v679 = vrsqrt.pop %v677
    %v680 = vmul.f32 %v679, %v677
    %v681 = vmul.f32 %v680, %v679
    %v682 = vmul.f32 0.5, %v681
    %v683 = vsub.f32 1.5, %v682
    %v684 = vmul.f32 %v679, %v683
    %vm685 = vweird.f32 %v677
    %vm686 = vweird.f32 %v679
    %vm687 = vmor %vm685, %vm686
    %v688 = vsel %vm687, %v679, %v684
    %v689 = vrsqrt.pop %v678
    %v690 = vmul.f32 %v689, %v678
    %v691 = vmul.f32 %v690, %v689
    %v692 = vmul.f32 0.5, %v691
    %v693 = vsub.f32 1.5, %v692
    %v694 = vmul.f32 %v689, %v693
    %vm695 = vweird.f32 %v678
    %vm696 = vweird.f32 %v689
    %vm697 = vmor %vm695, %vm696
    %v698 = vsel %vm697, %v689, %v694
    %v699 = vmul.f32 %v665, %v688
    %v700 = vmul.f32 %v666, %v698
    %v702 = vperm.slane %v655, 0
    %v704 = vmul.f32 %v699, %v702
    %v705 = vmul.f32 %v700, %v702
    %v707 = vperm.slane %v656, 0
    %v709 = vadd.f32 %v704, %v707
    %v710 = vadd.f32 %v705, %v707
    %s711 = scalar_lea.vmem %s5, 32
    %v712 = vld [vmem:[%s711] sm:$0xff]
    %v713 = vld [vmem:[%s711 + $0x8] sm:$0xff]
    %v714 = vld [vmem:[%s711 + $0x10] sm:$0xff]
    %v715 = vld [vmem:[%s711 + $0x18] sm:$0xff]
    %s716 = scalar_lea.vmem %s6, 1
    %v717 = vld [vmem:[%s716] sm:$0x1]
    %v719 = vperm.slane %v717, 0
    %v722 = vsel %vm79, %v709, 0
    %v725 = vsel %vm79, %v710, 0
    %727 = vmatpush.msra.mxu0 0.0
    %728 = vmatpush.msra.mxu0 0.0
    %729 = vmatpush.msra.mxu0 0.0
    %730 = vmatpush.msra.mxu0 0.0
    %731 = vmatpush.msra.mxu0 0.0
    %732 = vmatpush.msra.mxu0 0.0
    %733 = vmatpush.msra.mxu0 0.0
    %734 = vmatpush.msra.mxu0 0.0
    %735 = vmatpush.msra.mxu0 0.0
    %736 = vmatpush.msra.mxu0 0.0
    %737 = vmatpush.msra.mxu0 0.0
    %738 = vmatpush.msra.mxu0 0.0
    %739 = vmatpush.msra.mxu0 %v715
    %740 = vmatpush.msra.mxu0 %v714
    %741 = vmatpush.msra.mxu0 %v713
    %742 = vmatpush.msra.mxu0 %v712
    %743 = vmatmul.f32.gmra.mxu0 %v722
    %v744 = vpop.f32.mrf.mxu0
    %v745 = vadd.f32 %v719, %v744
    %746 = vmatmul.f32.gmra.mxu0 %v725
    %v747 = vpop.f32.mrf.mxu0
    %v748 = vadd.f32 %v719, %v747
    %749 = vdwg.mxu0
    %751 = vrot.lane.b32.xlu0 %v745, 96
    %v752 = vpop.permute.xlu0 %751
    %v753 = vsel %vm182, %v745, 0
    %v755 = vsel %vm182, %v752, 0
    %757 = vmatpush.xpose.msra.mxu0 0.0
    %758 = vmatpush.xpose.msra.mxu0 0.0
    %759 = vmatpush.xpose.msra.mxu0 0.0
    %760 = vmatpush.xpose.msra.mxu0 0.0
    %761 = vmatpush.xpose.msra.mxu0 0.0
    %762 = vmatpush.xpose.msra.mxu0 0.0
    %763 = vmatpush.xpose.msra.mxu0 0.0
    %764 = vmatpush.xpose.msra.mxu0 0.0
    %765 = vmatpush.xpose.msra.mxu0 0.0
    %766 = vmatpush.xpose.msra.mxu0 0.0
    %767 = vmatpush.xpose.msra.mxu0 0.0
    %768 = vmatpush.xpose.msra.mxu0 0.0
    %769 = vmatpush.xpose.msra.mxu0 0.0
    %770 = vmatpush.xpose.msra.mxu0 0.0
    %771 = vmatpush.xpose.msra.mxu0 0.0
    %772 = vmatpush.xpose.msra.mxu0 %v755
    %773 = vmatmul.f32.gmra.mxu0 %v753
    %v774 = vpop.f32.mrf.mxu0
    %v775 = vadd.f32 0.0, %v774
    %776 = vdwg.mxu0
    %v777 = vmul.f32 %v775, 0.25
    %v778 = vadd.f32 %v777, %v208
    %v779 = vsel %vm210, %v778, -inf
    %780 = vmax.xlane.f32.xlu0 %v779
    %v781 = vpop.xlane.xlu0 %780
    %v782 = vsub.f32 %v778, %v781
    %v783 = vmul.f32 %v782, 1.442695
    %v784 = vpow.pop %v783
    %v785 = vsel %vm210, %v784, 0.0
    %786 = vadd.xlane.f32.xlu0 %v785
    %v787 = vpop.xlane.xlu0 %786
    %v788 = vrcp.pop %v787
    %v789 = vmul.f32 %v784, %v788
    %790 = vrot.lane.b32.xlu0 %v745, 64
    %v791 = vpop.permute.xlu0 %790
    %v794 = vsel %vm210, %v789, 0
    %796 = vmatpush.msra.mxu0 0.0
    %797 = vmatpush.msra.mxu0 0.0
    %798 = vmatpush.msra.mxu0 0.0
    %799 = vmatpush.msra.mxu0 0.0
    %800 = vmatpush.msra.mxu0 0.0
    %801 = vmatpush.msra.mxu0 0.0
    %802 = vmatpush.msra.mxu0 0.0
    %803 = vmatpush.msra.mxu0 0.0
    %804 = vmatpush.msra.mxu0 0.0
    %805 = vmatpush.msra.mxu0 0.0
    %806 = vmatpush.msra.mxu0 0.0
    %807 = vmatpush.msra.mxu0 0.0
    %808 = vmatpush.msra.mxu0 0.0
    %809 = vmatpush.msra.mxu0 0.0
    %810 = vmatpush.msra.mxu0 0.0
    %811 = vmatpush.msra.mxu0 %v791
    %812 = vmatmul.f32.gmra.mxu0 %v794
    %v813 = vpop.f32.mrf.mxu0
    %v814 = vadd.f32 0.0, %v813
    %815 = vdwg.mxu0
    %816 = vrot.lane.b32.xlu0 %v745, 112
    %v817 = vpop.permute.xlu0 %816
    %818 = vrot.lane.b32.xlu0 %v745, 80
    %v819 = vpop.permute.xlu0 %818
    %v820 = vsel %vm182, %v817, 0
    %v822 = vsel %vm182, %v819, 0
    %824 = vmatpush.xpose.msra.mxu0 0.0
    %825 = vmatpush.xpose.msra.mxu0 0.0
    %826 = vmatpush.xpose.msra.mxu0 0.0
    %827 = vmatpush.xpose.msra.mxu0 0.0
    %828 = vmatpush.xpose.msra.mxu0 0.0
    %829 = vmatpush.xpose.msra.mxu0 0.0
    %830 = vmatpush.xpose.msra.mxu0 0.0
    %831 = vmatpush.xpose.msra.mxu0 0.0
    %832 = vmatpush.xpose.msra.mxu0 0.0
    %833 = vmatpush.xpose.msra.mxu0 0.0
    %834 = vmatpush.xpose.msra.mxu0 0.0
    %835 = vmatpush.xpose.msra.mxu0 0.0
    %836 = vmatpush.xpose.msra.mxu0 0.0
    %837 = vmatpush.xpose.msra.mxu0 0.0
    %838 = vmatpush.xpose.msra.mxu0 0.0
    %839 = vmatpush.xpose.msra.mxu0 %v822
    %840 = vmatmul.f32.gmra.mxu0 %v820
    %v841 = vpop.f32.mrf.mxu0
    %v842 = vadd.f32 0.0, %v841
    %843 = vdwg.mxu0
    %v844 = vmul.f32 %v842, 0.25
    %v845 = vadd.f32 %v844, %v208
    %v846 = vsel %vm210, %v845, -inf
    %847 = vmax.xlane.f32.xlu0 %v846
    %v848 = vpop.xlane.xlu0 %847
    %v849 = vsub.f32 %v845, %v848
    %v850 = vmul.f32 %v849, 1.442695
    %v851 = vpow.pop %v850
    %v852 = vsel %vm210, %v851, 0.0
    %853 = vadd.xlane.f32.xlu0 %v852
    %v854 = vpop.xlane.xlu0 %853
    %v855 = vrcp.pop %v854
    %v856 = vmul.f32 %v851, %v855
    %857 = vrot.lane.b32.xlu0 %v745, 48
    %v858 = vpop.permute.xlu0 %857
    %v861 = vsel %vm210, %v856, 0
    %863 = vmatpush.msra.mxu0 0.0
    %864 = vmatpush.msra.mxu0 0.0
    %865 = vmatpush.msra.mxu0 0.0
    %866 = vmatpush.msra.mxu0 0.0
    %867 = vmatpush.msra.mxu0 0.0
    %868 = vmatpush.msra.mxu0 0.0
    %869 = vmatpush.msra.mxu0 0.0
    %870 = vmatpush.msra.mxu0 0.0
    %871 = vmatpush.msra.mxu0 0.0
    %872 = vmatpush.msra.mxu0 0.0
    %873 = vmatpush.msra.mxu0 0.0
    %874 = vmatpush.msra.mxu0 0.0
    %875 = vmatpush.msra.mxu0 0.0
    %876 = vmatpush.msra.mxu0 0.0
    %877 = vmatpush.msra.mxu0 0.0
    %878 = vmatpush.msra.mxu0 %v858
    %879 = vmatmul.f32.gmra.mxu0 %v861
    %v880 = vpop.f32.mrf.mxu0
    %v881 = vadd.f32 0.0, %v880
    %882 = vdwg.mxu0
    %884 = vrot.lane.b32.xlu0 %v881, 16
    %v885 = vpop.permute.xlu0 %884
    %v887 = vsel %vm182, %v814, %v885
    %889 = vrot.lane.b32.xlu0 %v748, 96
    %v890 = vpop.permute.xlu0 %889
    %v891 = vsel %vm182, %v748, 0
    %v893 = vsel %vm182, %v890, 0
    %895 = vmatpush.xpose.msra.mxu0 0.0
    %896 = vmatpush.xpose.msra.mxu0 0.0
    %897 = vmatpush.xpose.msra.mxu0 0.0
    %898 = vmatpush.xpose.msra.mxu0 0.0
    %899 = vmatpush.xpose.msra.mxu0 0.0
    %900 = vmatpush.xpose.msra.mxu0 0.0
    %901 = vmatpush.xpose.msra.mxu0 0.0
    %902 = vmatpush.xpose.msra.mxu0 0.0
    %903 = vmatpush.xpose.msra.mxu0 0.0
    %904 = vmatpush.xpose.msra.mxu0 0.0
    %905 = vmatpush.xpose.msra.mxu0 0.0
    %906 = vmatpush.xpose.msra.mxu0 0.0
    %907 = vmatpush.xpose.msra.mxu0 0.0
    %908 = vmatpush.xpose.msra.mxu0 0.0
    %909 = vmatpush.xpose.msra.mxu0 0.0
    %910 = vmatpush.xpose.msra.mxu0 %v893
    %911 = vmatmul.f32.gmra.mxu0 %v891
    %v912 = vpop.f32.mrf.mxu0
    %v913 = vadd.f32 0.0, %v912
    %914 = vdwg.mxu0
    %v915 = vmul.f32 %v913, 0.25
    %v916 = vadd.f32 %v915, %v349
    %v917 = vsel %vm210, %v916, -inf
    %918 = vmax.xlane.f32.xlu0 %v917
    %v919 = vpop.xlane.xlu0 %918
    %v920 = vsub.f32 %v916, %v919
    %v921 = vmul.f32 %v920, 1.442695
    %v922 = vpow.pop %v921
    %v923 = vsel %vm210, %v922, 0.0
    %924 = vadd.xlane.f32.xlu0 %v923
    %v925 = vpop.xlane.xlu0 %924
    %v926 = vrcp.pop %v925
    %v927 = vmul.f32 %v922, %v926
    %928 = vrot.lane.b32.xlu0 %v748, 64
    %v929 = vpop.permute.xlu0 %928
    %v932 = vsel %vm210, %v927, 0
    %934 = vmatpush.msra.mxu0 0.0
    %935 = vmatpush.msra.mxu0 0.0
    %936 = vmatpush.msra.mxu0 0.0
    %937 = vmatpush.msra.mxu0 0.0
    %938 = vmatpush.msra.mxu0 0.0
    %939 = vmatpush.msra.mxu0 0.0
    %940 = vmatpush.msra.mxu0 0.0
    %941 = vmatpush.msra.mxu0 0.0
    %942 = vmatpush.msra.mxu0 0.0
    %943 = vmatpush.msra.mxu0 0.0
    %944 = vmatpush.msra.mxu0 0.0
    %945 = vmatpush.msra.mxu0 0.0
    %946 = vmatpush.msra.mxu0 0.0
    %947 = vmatpush.msra.mxu0 0.0
    %948 = vmatpush.msra.mxu0 0.0
    %949 = vmatpush.msra.mxu0 %v929
    %950 = vmatmul.f32.gmra.mxu0 %v932
    %v951 = vpop.f32.mrf.mxu0
    %v952 = vadd.f32 0.0, %v951
    %953 = vdwg.mxu0
    %954 = vrot.lane.b32.xlu0 %v748, 112
    %v955 = vpop.permute.xlu0 %954
    %956 = vrot.lane.b32.xlu0 %v748, 80
    %v957 = vpop.permute.xlu0 %956
    %v958 = vsel %vm182, %v955, 0
    %v960 = vsel %vm182, %v957, 0
    %962 = vmatpush.xpose.msra.mxu0 0.0
    %963 = vmatpush.xpose.msra.mxu0 0.0
    %964 = vmatpush.xpose.msra.mxu0 0.0
    %965 = vmatpush.xpose.msra.mxu0 0.0
    %966 = vmatpush.xpose.msra.mxu0 0.0
    %967 = vmatpush.xpose.msra.mxu0 0.0
    %968 = vmatpush.xpose.msra.mxu0 0.0
    %969 = vmatpush.xpose.msra.mxu0 0.0
    %970 = vmatpush.xpose.msra.mxu0 0.0
    %971 = vmatpush.xpose.msra.mxu0 0.0
    %972 = vmatpush.xpose.msra.mxu0 0.0
    %973 = vmatpush.xpose.msra.mxu0 0.0
    %974 = vmatpush.xpose.msra.mxu0 0.0
    %975 = vmatpush.xpose.msra.mxu0 0.0
    %976 = vmatpush.xpose.msra.mxu0 0.0
    %977 = vmatpush.xpose.msra.mxu0 %v960
    %978 = vmatmul.f32.gmra.mxu0 %v958
    %v979 = vpop.f32.mrf.mxu0
    %v980 = vadd.f32 0.0, %v979
    %981 = vdwg.mxu0
    %v982 = vmul.f32 %v980, 0.25
    %v983 = vadd.f32 %v982, %v349
    %v984 = vsel %vm210, %v983, -inf
    %985 = vmax.xlane.f32.xlu0 %v984
    %v986 = vpop.xlane.xlu0 %985
    %v987 = vsub.f32 %v983, %v986
    %v988 = vmul.f32 %v987, 1.442695
    %v989 = vpow.pop %v988
    %v990 = vsel %vm210, %v989, 0.0
    %991 = vadd.xlane.f32.xlu0 %v990
    %v992 = vpop.xlane.xlu0 %991
    %v993 = vrcp.pop %v992
    %v994 = vmul.f32 %v989, %v993
    %995 = vrot.lane.b32.xlu0 %v748, 48
    %v996 = vpop.permute.xlu0 %995
    %v999 = vsel %vm210, %v994, 0
    %1001 = vmatpush.msra.mxu0 0.0
    %1002 = vmatpush.msra.mxu0 0.0
    %1003 = vmatpush.msra.mxu0 0.0
    %1004 = vmatpush.msra.mxu0 0.0
    %1005 = vmatpush.msra.mxu0 0.0
    %1006 = vmatpush.msra.mxu0 0.0
    %1007 = vmatpush.msra.mxu0 0.0
    %1008 = vmatpush.msra.mxu0 0.0
    %1009 = vmatpush.msra.mxu0 0.0
    %1010 = vmatpush.msra.mxu0 0.0
    %1011 = vmatpush.msra.mxu0 0.0
    %1012 = vmatpush.msra.mxu0 0.0
    %1013 = vmatpush.msra.mxu0 0.0
    %1014 = vmatpush.msra.mxu0 0.0
    %1015 = vmatpush.msra.mxu0 0.0
    %1016 = vmatpush.msra.mxu0 %v996
    %1017 = vmatmul.f32.gmra.mxu0 %v999
    %v1018 = vpop.f32.mrf.mxu0
    %v1019 = vadd.f32 0.0, %v1018
    %1020 = vdwg.mxu0
    %1022 = vrot.lane.b32.xlu0 %v1019, 16
    %v1023 = vpop.permute.xlu0 %1022
    %v1025 = vsel %vm182, %v952, %v1023
    %s1026 = scalar_lea.vmem %s7, 32
    %v1027 = vld [vmem:[%s1026] sm:$0xff]
    %v1028 = vld [vmem:[%s1026 + $0x8] sm:$0xff]
    %v1029 = vld [vmem:[%s1026 + $0x10] sm:$0xff]
    %v1030 = vld [vmem:[%s1026 + $0x18] sm:$0xff]
    %s1031 = scalar_lea.vmem %s8, 1
    %v1032 = vld [vmem:[%s1031] sm:$0x1]
    %v1034 = vperm.slane %v1032, 0
    %v1037 = vsel %vm79, %v887, 0
    %v1040 = vsel %vm79, %v1025, 0
    %1042 = vmatpush.msra.mxu0 0.0
    %1043 = vmatpush.msra.mxu0 0.0
    %1044 = vmatpush.msra.mxu0 0.0
    %1045 = vmatpush.msra.mxu0 0.0
    %1046 = vmatpush.msra.mxu0 0.0
    %1047 = vmatpush.msra.mxu0 0.0
    %1048 = vmatpush.msra.mxu0 0.0
    %1049 = vmatpush.msra.mxu0 0.0
    %1050 = vmatpush.msra.mxu0 0.0
    %1051 = vmatpush.msra.mxu0 0.0
    %1052 = vmatpush.msra.mxu0 0.0
    %1053 = vmatpush.msra.mxu0 0.0
    %1054 = vmatpush.msra.mxu0 %v1030
    %1055 = vmatpush.msra.mxu0 %v1029
    %1056 = vmatpush.msra.mxu0 %v1028
    %1057 = vmatpush.msra.mxu0 %v1027
    %1058 = vmatmul.f32.gmra.mxu0 %v1037
    %v1059 = vpop.f32.mrf.mxu0
    %v1060 = vadd.f32 %v1034, %v1059
    %1061 = vmatmul.f32.gmra.mxu0 %v1040
    %v1062 = vpop.f32.mrf.mxu0
    %v1063 = vadd.f32 %v1034, %v1062
    %1064 = vdwg.mxu0
    %v1065 = vadd.f32 %v709, %v1060
    %v1066 = vadd.f32 %v710, %v1063
    %s1067 = scalar_lea.vmem %s9, 1
    %v1068 = vld [vmem:[%s1067] sm:$0x1]
    %s1069 = scalar_lea.vmem %s10, 1
    %v1070 = vld [vmem:[%s1069] sm:$0x1]
    %v1071 = vsel %vm79, %v1065, 0.0
    %1072 = vadd.xlane.f32.xlu0 %v1071
    %v1073 = vpop.xlane.xlu0 %1072
    %v1074 = vsel %vm79, %v1066, 0.0
    %1075 = vadd.xlane.f32.xlu0 %v1074
    %v1076 = vpop.xlane.xlu0 %1075
    %v1077 = vmul.f32 %v1073, %v92
    %v1078 = vmul.f32 %v1076, %v92
    %v1079 = vsub.f32 %v1065, %v1077
    %v1080 = vsub.f32 %v1066, %v1078
    %v1081 = vmul.f32 %v1079, %v1079
    %v1082 = vmul.f32 %v1080, %v1080
    %v1083 = vsel %vm79, %v1081, 0.0
    %1084 = vadd.xlane.f32.xlu0 %v1083
    %v1085 = vpop.xlane.xlu0 %1084
    %v1086 = vsel %vm79, %v1082, 0.0
    %1087 = vadd.xlane.f32.xlu0 %v1086
    %v1088 = vpop.xlane.xlu0 %1087
    %v1089 = vmul.f32 %v1085, %v92
    %v1090 = vmul.f32 %v1088, %v92
    %v1091 = vadd.f32 %v1089, 1e-05
    %v1092 = vadd.f32 %v1090, 1e-05
    %v1093 = vrsqrt.pop %v1091
    %v1094 = vmul.f32 %v1093, %v1091
    %v1095 = vmul.f32 %v1094, %v1093
    %v1096 = vmul.f32 0.5, %v1095
    %v1097 = vsub.f32 1.5, %v1096
    %v1098 = vmul.f32 %v1093, %v1097
    %vm1099 = vweird.f32 %v1091
    %vm1100 = vweird.f32 %v1093
    %vm1101 = vmor %vm1099, %vm1100
    %v1102 = vsel %vm1101, %v1093, %v1098
    %v1103 = vrsqrt.pop %v1092
    %v1104 = vmul.f32 %v1103, %v1092
    %v1105 = vmul.f32 %v1104, %v1103
    %v1106 = vmul.f32 0.5, %v1105
    %v1107 = vsub.f32 1.5, %v1106
    %v1108 = vmul.f32 %v1103, %v1107
    %vm1109 = vweird.f32 %v1092
    %vm1110 = vweird.f32 %v1103
    %vm1111 = vmor %vm1109, %vm1110
    %v1112 = vsel %vm1111, %v1103, %v1108
    %v1113 = vmul.f32 %v1079, %v1102
    %v1114 = vmul.f32 %v1080, %v1112
    %v1116 = vperm.slane %v1068, 0
    %v1118 = vmul.f32 %v1113, %v1116
    %v1119 = vmul.f32 %v1114, %v1116
    %v1121 = vperm.slane %v1070, 0
    %v1123 = vadd.f32 %v1118, %v1121
    %v1124 = vadd.f32 %v1119, %v1121
    %s1125 = scalar_lea.vmem %s11, 32
    %v1126 = vld [vmem:[%s1125] sm:$0xff]
    %v1127 = vld [vmem:[%s1125 + $0x8] sm:$0xff]
    %v1128 = vld [vmem:[%s1125 + $0x10] sm:$0xff]
    %v1129 = vld [vmem:[%s1125 + $0x18] sm:$0xff]
    %s1130 = scalar_lea.vmem %s12, 1
    %v1131 = vld [vmem:[%s1130] sm:$0x1]
    %v1133 = vperm.slane %v1131, 0
    %v1136 = vsel %vm79, %v1123, 0
    %v1139 = vsel %vm79, %v1124, 0
    %1141 = vmatpush.msra.mxu0 0.0
    %1142 = vmatpush.msra.mxu0 0.0
    %1143 = vmatpush.msra.mxu0 0.0
    %1144 = vmatpush.msra.mxu0 0.0
    %1145 = vmatpush.msra.mxu0 0.0
    %1146 = vmatpush.msra.mxu0 0.0
    %1147 = vmatpush.msra.mxu0 0.0
    %1148 = vmatpush.msra.mxu0 0.0
    %1149 = vmatpush.msra.mxu0 0.0
    %1150 = vmatpush.msra.mxu0 0.0
    %1151 = vmatpush.msra.mxu0 0.0
    %1152 = vmatpush.msra.mxu0 0.0
    %1153 = vmatpush.msra.mxu0 %v1129
    %1154 = vmatpush.msra.mxu0 %v1128
    %1155 = vmatpush.msra.mxu0 %v1127
    %1156 = vmatpush.msra.mxu0 %v1126
    %1157 = vmatmul.f32.gmra.mxu0 %v1136
    %v1158 = vpop.f32.mrf.mxu0
    %v1159 = vadd.f32 %v1133, %v1158
    %1160 = vmatmul.f32.gmra.mxu0 %v1139
    %v1161 = vpop.f32.mrf.mxu0
    %v1162 = vadd.f32 %v1133, %v1161
    %1163 = vdwg.mxu0
    %v1164 = vmul.f32 %v1159, %v1159
    %v1165 = vmul.f32 %v1162, %v1162
    %v1166 = vmul.f32 %v1159, %v1164
    %v1167 = vmul.f32 %v1162, %v1165
    %v1168 = vmul.f32 %v1166, 0.044715
    %v1169 = vmul.f32 %v1167, 0.044715
    %v1170 = vadd.f32 %v1159, %v1168
    %v1171 = vadd.f32 %v1162, %v1169
    %v1172 = vmul.f32 %v1170, 0.7978846
    %v1173 = vmul.f32 %v1171, 0.7978846
    %v1174 = vtanh.pop %v1172
    %v1175 = vtanh.pop %v1173
    %v1176 = vadd.f32 %v1174, 1.0
    %v1177 = vadd.f32 %v1175, 1.0
    %v1178 = vmul.f32 %v1176, 0.5
    %v1179 = vmul.f32 %v1177, 0.5
    %v1180 = vmul.f32 %v1159, %v1178
    %v1181 = vmul.f32 %v1162, %v1179
    %s1182 = scalar_lea.vmem %s13, 128
    %v1183 = vld [vmem:[%s1182] sm:$0xff]
    %v1184 = vld [vmem:[%s1182 + $0x8] sm:$0xff]
    %v1185 = vld [vmem:[%s1182 + $0x10] sm:$0xff]
    %v1186 = vld [vmem:[%s1182 + $0x18] sm:$0xff]
    %v1187 = vld [vmem:[%s1182 + $0x20] sm:$0xff]
    %v1188 = vld [vmem:[%s1182 + $0x28] sm:$0xff]
    %v1189 = vld [vmem:[%s1182 + $0x30] sm:$0xff]
    %v1190 = vld [vmem:[%s1182 + $0x38] sm:$0xff]
    %v1191 = vld [vmem:[%s1182 + $0x40] sm:$0xff]
    %v1192 = vld [vmem:[%s1182 + $0x48] sm:$0xff]
    %v1193 = vld [vmem:[%s1182 + $0x50] sm:$0xff]
    %v1194 = vld [vmem:[%s1182 + $0x58] sm:$0xff]
    %v1195 = vld [vmem:[%s1182 + $0x60] sm:$0xff]
    %v1196 = vld [vmem:[%s1182 + $0x68] sm:$0xff]
    %v1197 = vld [vmem:[%s1182 + $0x70] sm:$0xff]
    %v1198 = vld [vmem:[%s1182 + $0x78] sm:$0xff]
    %s1199 = scalar_lea.vmem %s14, 1
    %v1200 = vld [vmem:[%s1199] sm:$0x1]
    %v1202 = vperm.slane %v1200, 0
    %1204 = vmatpush.msra.mxu0 %v1198
    %1205 = vmatpush.msra.mxu0 %v1197
    %1206 = vmatpush.msra.mxu0 %v1196
    %1207 = vmatpush.msra.mxu0 %v1195
    %1208 = vmatpush.msra.mxu0 %v1194
    %1209 = vmatpush.msra.mxu0 %v1193
    %1210 = vmatpush.msra.mxu0 %v1192
    %1211 = vmatpush.msra.mxu0 %v1191
    %1212 = vmatpush.msra.mxu0 %v1190
    %1213 = vmatpush.msra.mxu0 %v1189
    %1214 = vmatpush.msra.mxu0 %v1188
    %1215 = vmatpush.msra.mxu0 %v1187
    %1216 = vmatpush.msra.mxu0 %v1186
    %1217 = vmatpush.msra.mxu0 %v1185
    %1218 = vmatpush.msra.mxu0 %v1184
    %1219 = vmatpush.msra.mxu0 %v1183
    %1220 = vmatmul.f32.gmra.mxu0 %v1180
    %v1221 = vpop.f32.mrf.mxu0
    %v1222 = vadd.f32 %v1202, %v1221
    %1223 = vmatmul.f32.gmra.mxu0 %v1181
    %v1224 = vpop.f32.mrf.mxu0
    %v1225 = vadd.f32 %v1202, %v1224
    %1226 = vdwg.mxu0
    %v1227 = vadd.f32 %v1123, %v1222
    %v1228 = vadd.f32 %v1124, %v1225
    %s1229 = scalar_lea.vmem %s15, 1
    %v1230 = vld [vmem:[%s1229] sm:$0x1]
    %s1231 = scalar_lea.vmem %s16, 1
    %v1232 = vld [vmem:[%s1231] sm:$0x1]
    %v1233 = vsel %vm79, %v1227, 0.0
    %1234 = vadd.xlane.f32.xlu0 %v1233
    %v1235 = vpop.xlane.xlu0 %1234
    %v1236 = vsel %vm79, %v1228, 0.0
    %1237 = vadd.xlane.f32.xlu0 %v1236
    %v1238 = vpop.xlane.xlu0 %1237
    %v1239 = vmul.f32 %v1235, %v92
    %v1240 = vmul.f32 %v1238, %v92
    %v1241 = vsub.f32 %v1227, %v1239
    %v1242 = vsub.f32 %v1228, %v1240
    %v1243 = vmul.f32 %v1241, %v1241
    %v1244 = vmul.f32 %v1242, %v1242
    %v1245 = vsel %vm79, %v1243, 0.0
    %1246 = vadd.xlane.f32.xlu0 %v1245
    %v1247 = vpop.xlane.xlu0 %1246
    %v1248 = vsel %vm79, %v1244, 0.0
    %1249 = vadd.xlane.f32.xlu0 %v1248
    %v1250 = vpop.xlane.xlu0 %1249
    %v1251 = vmul.f32 %v1247, %v92
    %v1252 = vmul.f32 %v1250, %v92
    %v1253 = vadd.f32 %v1251, 1e-05
    %v1254 = vadd.f32 %v1252, 1e-05
    %v1255 = vrsqrt.pop %v1253
    %v1256 = vmul.f32 %v1255, %v1253
    %v1257 = vmul.f32 %v1256, %v1255
    %v1258 = vmul.f32 0.5, %v1257
    %v1259 = vsub.f32 1.5, %v1258
    %v1260 = vmul.f32 %v1255, %v1259
    %vm1261 = vweird.f32 %v1253
    %vm1262 = vweird.f32 %v1255
    %vm1263 = vmor %vm1261, %vm1262
    %v1264 = vsel %vm1263, %v1255, %v1260
    %v1265 = vrsqrt.pop %v1254
    %v1266 = vmul.f32 %v1265, %v1254
    %v1267 = vmul.f32 %v1266, %v1265
    %v1268 = vmul.f32 0.5, %v1267
    %v1269 = vsub.f32 1.5, %v1268
    %v1270 = vmul.f32 %v1265, %v1269
    %vm1271 = vweird.f32 %v1254
    %vm1272 = vweird.f32 %v1265
    %vm1273 = vmor %vm1271, %vm1272
    %v1274 = vsel %vm1273, %v1265, %v1270
    %v1275 = vmul.f32 %v1241, %v1264
    %v1276 = vmul.f32 %v1242, %v1274
    %v1278 = vperm.slane %v1230, 0
    %v1280 = vmul.f32 %v1275, %v1278
    %v1281 = vmul.f32 %v1276, %v1278
    %v1283 = vperm.slane %v1232, 0
    %v1285 = vadd.f32 %v1280, %v1283
    %v1286 = vadd.f32 %v1281, %v1283
    %v1288 = vrot.slane %v1286, 7
    %vm1290 = vcmask 1040384
    %v1291 = vsel %vm1290, %v1285, %v1288
    %v1292 = vld [vmem:[%s2] sm:$0x3]
    %v1293 = vld [vmem:[%s17] sm:$0xff]
    %v1294 = vld [vmem:[%s17 + $0x8] sm:$0xff]
    %v1295 = vld [vmem:[%s17 + $0x10] sm:$0xff]
    %v1296 = vld [vmem:[%s17 + $0x18] sm:$0xff]
    %v1297 = vld [vmem:[%s17 + $0x20] sm:$0xff]
    %v1298 = vld [vmem:[%s17 + $0x28] sm:$0xff]
    %v1299 = vld [vmem:[%s17 + $0x30] sm:$0xff]
    %v1300 = vld [vmem:[%s17 + $0x38] sm:$0xff]
    %v1301 = vld [vmem:[%s18] sm:$0x1]
    %v1303 = vperm.slane %v1301, 0
    %vm1305 = vcmask 523264
    %v1307 = vsel %vm1305, %v1292, 0
    %1309 = vmatpush.msra.mxu0 0.0
    %1310 = vmatpush.msra.mxu0 0.0
    %1311 = vmatpush.msra.mxu0 0.0
    %1312 = vmatpush.msra.mxu0 0.0
    %1313 = vmatpush.msra.mxu0 0.0
    %1314 = vmatpush.msra.mxu0 0.0
    %1315 = vmatpush.msra.mxu0 0.0
    %1316 = vmatpush.msra.mxu0 0.0
    %1317 = vmatpush.msra.mxu0 %v1300
    %1318 = vmatpush.msra.mxu0 %v1299
    %1319 = vmatpush.msra.mxu0 %v1298
    %1320 = vmatpush.msra.mxu0 %v1297
    %1321 = vmatpush.msra.mxu0 %v1296
    %1322 = vmatpush.msra.mxu0 %v1295
    %1323 = vmatpush.msra.mxu0 %v1294
    %1324 = vmatpush.msra.mxu0 %v1293
    %1325 = vmatmul.f32.gmra.mxu0 %v1307
    %v1326 = vpop.f32.mrf.mxu0
    %v1327 = vadd.f32 %v1303, %v1326
    %1328 = vdwg.mxu0
    %v1329 = vmax.f32 %v1327, 0.0
    %1331 = vrot.lane.b32.xlu0 %v1329, 32
    %v1332 = vpop.permute.xlu0 %1331
    %v1334 = vsel %vm79, %v1291, %v1332
    %v1335 = vld [vmem:[%s19] sm:$0xff]
    %v1336 = vld [vmem:[%s19 + $0x8] sm:$0xff]
    %v1337 = vld [vmem:[%s19 + $0x10] sm:$0xff]
    %v1338 = vld [vmem:[%s19 + $0x18] sm:$0xff]
    %v1339 = vld [vmem:[%s19 + $0x20] sm:$0xff]
    %v1340 = vld [vmem:[%s19 + $0x28] sm:$0xff]
    %v1341 = vld [vmem:[%s19 + $0x30] sm:$0xff]
    %v1342 = vld [vmem:[%s19 + $0x38] sm:$0xff]
    %v1343 = vld [vmem:[%s19 + $0x40] sm:$0xff]
    %v1344 = vld [vmem:[%s19 + $0x48] sm:$0xff]
    %v1345 = vld [vmem:[%s19 + $0x50] sm:$0xff]
    %v1346 = vld [vmem:[%s19 + $0x58] sm:$0xff]
    %v1347 = vld [vmem:[%s20] sm:$0x1]
    %v1349 = vperm.slane %v1347, 0
    %vm1351 = vcmask 785408
    %v1353 = vsel %vm1351, %v1334, 0
    %1355 = vmatpush.msra.mxu0 0.0
    %1356 = vmatpush.msra.mxu0 0.0
    %1357 = vmatpush.msra.mxu0 0.0
    %1358 = vmatpush.msra.mxu0 0.0
    %1359 = vmatpush.msra.mxu0 %v1346
    %1360 = vmatpush.msra.mxu0 %v1345
    %1361 = vmatpush.msra.mxu0 %v1344
    %1362 = vmatpush.msra.mxu0 %v1343
    %1363 = vmatpush.msra.mxu0 %v1342
    %1364 = vmatpush.msra.mxu0 %v1341
    %1365 = vmatpush.msra.mxu0 %v1340
    %1366 = vmatpush.msra.mxu0 %v1339
    %1367 = vmatpush.msra.mxu0 %v1338
    %1368 = vmatpush.msra.mxu0 %v1337
    %1369 = vmatpush.msra.mxu0 %v1336
    %1370 = vmatpush.msra.mxu0 %v1335
    %1371 = vmatmul.f32.gmra.mxu0 %v1353
    %v1372 = vpop.f32.mrf.mxu0
    %v1373 = vadd.f32 %v1349, %v1372
    %1374 = vdwg.mxu0
    %v1375 = vmax.f32 %v1373, 0.0
    %v1376 = vld [vmem:[%s21] sm:$0xff]
    %v1377 = vld [vmem:[%s21 + $0x8] sm:$0xff]
    %v1378 = vld [vmem:[%s21 + $0x10] sm:$0xff]
    %v1379 = vld [vmem:[%s21 + $0x18] sm:$0xff]
    %v1380 = vld [vmem:[%s21 + $0x20] sm:$0xff]
    %v1381 = vld [vmem:[%s21 + $0x28] sm:$0xff]
    %v1382 = vld [vmem:[%s21 + $0x30] sm:$0xff]
    %v1383 = vld [vmem:[%s21 + $0x38] sm:$0xff]
    %v1384 = vld [vmem:[%s21 + $0x40] sm:$0xff]
    %v1385 = vld [vmem:[%s21 + $0x48] sm:$0xff]
    %v1386 = vld [vmem:[%s21 + $0x50] sm:$0xff]
    %v1387 = vld [vmem:[%s21 + $0x58] sm:$0xff]
    %v1388 = vld [vmem:[%s21 + $0x60] sm:$0xff]
    %v1389 = vld [vmem:[%s21 + $0x68] sm:$0xff]
    %v1390 = vld [vmem:[%s21 + $0x70] sm:$0xff]
    %v1391 = vld [vmem:[%s21 + $0x78] sm:$0xff]
    %v1392 = vld [vmem:[%s22] sm:$0x1]
    %v1394 = vperm.slane %v1392, 0
    %1396 = vmatpush.msra.mxu0 %v1391
    %1397 = vmatpush.msra.mxu0 %v1390
    %1398 = vmatpush.msra.mxu0 %v1389
    %1399 = vmatpush.msra.mxu0 %v1388
    %1400 = vmatpush.msra.mxu0 %v1387
    %1401 = vmatpush.msra.mxu0 %v1386
    %1402 = vmatpush.msra.mxu0 %v1385
    %1403 = vmatpush.msra.mxu0 %v1384
    %1404 = vmatpush.msra.mxu0 %v1383
    %1405 = vmatpush.msra.mxu0 %v1382
    %1406 = vmatpush.msra.mxu0 %v1381
    %1407 = vmatpush.msra.mxu0 %v1380
    %1408 = vmatpush.msra.mxu0 %v1379
    %1409 = vmatpush.msra.mxu0 %v1378
    %1410 = vmatpush.msra.mxu0 %v1377
    %1411 = vmatpush.msra.mxu0 %v1376
    %1412 = vmatmul.f32.gmra.mxu0 %v1375
    %v1413 = vpop.f32.mrf.mxu0
    %v1414 = vadd.f32 %v1394, %v1413
    %1415 = vdwg.mxu0
    %1416 = vst [vmem:[#allocation2] sm:$0x3] %v1414
    // Predicated region
    $region94: #{hybrid_phobert_classifier.1} parent=1 // pred_check
      _
    $region95: #{hybrid_phobert_classifier.1} parent=1 // pred_check_branch
      %1418 = sbr.rel (0) target = $region97
    $region96: #{hybrid_phobert_classifier.1} parent=1 // pred_region
      %1420 = vsyncadd [#allocation3], 0
      %s1422 = sshll.u32 [#allocation2], 4
      %s1423 = int_to_ptr.vmem [resolvable:$true] %s1422
      %s1424 = sshll.u32 %s23, 4
      %s1425 = int_to_ptr.hbm [resolvable:$true] %s1424
      %1427 = dma.vmem_to_hbm [thread:$0]  %s1423, 32, %s1425, [#allocation3]
    $region97: #{hybrid_phobert_classifier.1} parent=1 // pred_fallthru
      _
    // Predicated region
    $region98: #{hybrid_phobert_classifier.1} parent=1 // pred_check
      _
    $region99: #{hybrid_phobert_classifier.1} parent=1 // pred_check_branch
      %1429 = sbr.rel (0) target = $region101
    $region100: #{hybrid_phobert_classifier.1} parent=1 // pred_region
      %1431 = dma.done [#allocation3], 32
    $region101: #{hybrid_phobert_classifier.1} parent=1 // pred_fallthru
      _
    %1432 = vsyncpa [#allocation3], 1

</llo_original>
